<compile_context>
chip_gen: v5e
topology: v5e:2x2
jax: 0.10.0
libtpu: 0.0.40
codegen_flags: <defaults>
</compile_context>

<pallas_src>
import functools

import jax
import jax.numpy as jnp
from jax import lax
from jax.experimental import pallas as pl
from jax.experimental.pallas import tpu as pltpu

# ---------------- synthetic DBRX config (small) ----------------
VOCAB = 128
D_MODEL = 32
N_LAYERS = 2
N_HEADS = 4
KV_HEADS = 2                      # GQA
HEAD_DIM = D_MODEL // N_HEADS     # 8
FFN_HIDDEN = 64                   # moe ffn_hidden_size
N_EXPERTS = 4                     # moe_num_experts
TOP_K = 2                         # moe_top_k
CLIP_QKV = 8.0
ROPE_THETA = 10000.0
EPS = 1e-5

DTYPE = jnp.bfloat16              # activation / weight dtype (MXU-native)

# 40 MiB scoped VMEM: safe on v7x (64 MiB physical); v5e/v6e (128 MiB) could be
# raised toward 96 MiB for bigger tiles.
VMEM_LIMIT = 40 * 1024 * 1024

# tile targets (engage only when the dim is an exact multiple; small dims fall
# back to the full extent which always satisfies the (8,128) constraint).
TM_TARGET = 512
TN_TARGET = 512
TK_TARGET = 1024
TOKEN_TILE = 256                  # v7x-safe; v5e/v6e could use 512
SEQ_TILE = 256
MOE_CHUNK = 512                   # ffn-hidden chunk for streamed expert weights


def _tile(dim, target):
    """Largest usable tile: `target` if it evenly divides `dim`, else full dim."""
    return target if (dim > target and dim % target == 0) else dim


# ---------------- LayerNorm kernel ----------------
def _ln_kernel(x_ref, w_ref, o_ref):
    x = x_ref[...].astype(jnp.float32)
    mean = jnp.mean(x, axis=-1, keepdims=True)
    xc = x - mean
    var = jnp.mean(xc * xc, axis=-1, keepdims=True)
    y = xc * lax.rsqrt(var + EPS)
    o_ref[...] = (y * w_ref[...].astype(jnp.float32)).astype(o_ref.dtype)


def layernorm(x, w):
    T, D = x.shape
    tt = _tile(T, TOKEN_TILE)
    return pl.pallas_call(
        _ln_kernel,
        out_shape=jax.ShapeDtypeStruct((T, D), x.dtype),
        grid=(T // tt,),
        in_specs=[pl.BlockSpec((tt, D), lambda i: (i, 0)),
                  pl.BlockSpec((1, D), lambda i: (0, 0))],
        out_specs=pl.BlockSpec((tt, D), lambda i: (i, 0)),
        compiler_params=pltpu.CompilerParams(
            dimension_semantics=("parallel",),
            vmem_limit_bytes=VMEM_LIMIT),
    )(x, w.reshape(1, D))


# ---------------- tiled matmul (optional fused clamp) ----------------
def _matmul_kernel(x_ref, w_ref, o_ref, acc_ref, *, clip):
    @pl.when(pl.program_id(2) == 0)
    def _():
        acc_ref[...] = jnp.zeros_like(acc_ref)

    acc_ref[...] += jnp.dot(x_ref[...], w_ref[...],
                            preferred_element_type=jnp.float32)

    @pl.when(pl.program_id(2) == pl.num_programs(2) - 1)
    def _():
        acc = acc_ref[...]
        if clip is not None:
            acc = jnp.clip(acc, -clip, clip)
        o_ref[...] = acc.astype(o_ref.dtype)


def linear(x, w, clip=None):
    M, K = x.shape
    _, N = w.shape
    tm = _tile(M, TM_TARGET)
    tn = _tile(N, TN_TARGET)
    tk = _tile(K, TK_TARGET)
    kern = functools.partial(_matmul_kernel, clip=clip)
    return pl.pallas_call(
        kern,
        out_shape=jax.ShapeDtypeStruct((M, N), x.dtype),
        grid=(M // tm, N // tn, K // tk),
        in_specs=[pl.BlockSpec((tm, tk), lambda i, j, k: (i, k)),
                  pl.BlockSpec((tk, tn), lambda i, j, k: (k, j))],
        out_specs=pl.BlockSpec((tm, tn), lambda i, j, k: (i, j)),
        scratch_shapes=[pltpu.VMEM((tm, tn), jnp.float32)],
        compiler_params=pltpu.CompilerParams(
            dimension_semantics=("parallel", "parallel", "arbitrary"),
            vmem_limit_bytes=VMEM_LIMIT),
    )(x, w)


# ------- matmul with fused residual-add + LayerNorm (out_proj epilogue) -------
def _matmul_add_ln_kernel(x_ref, w_ref, r_ref, g_ref, y_ref, res_ref, acc_ref):
    k = pl.program_id(1)

    @pl.when(k == 0)
    def _():
        acc_ref[...] = jnp.zeros_like(acc_ref)

    acc_ref[...] += jnp.dot(x_ref[...], w_ref[...],
                            preferred_element_type=jnp.float32)

    @pl.when(k == pl.num_programs(1) - 1)
    def _():
        s = acc_ref[...] + r_ref[...].astype(jnp.float32)
        mean = jnp.mean(s, axis=-1, keepdims=True)
        sc = s - mean
        var = jnp.mean(sc * sc, axis=-1, keepdims=True)
        y = sc * lax.rsqrt(var + EPS)
        y_ref[...] = (y * g_ref[...].astype(jnp.float32)).astype(y_ref.dtype)
        res_ref[...] = s.astype(res_ref.dtype)


def linear_add_layernorm(x, w, residual, gamma):
    # out = LN(x @ w + residual); also returns the new residual (x @ w + residual).
    # tn is the full output width so the LN row reduction is in-tile.
    # TODO(synk): shrink tm per-generation (v7x) so the tm x N f32 accumulator
    #             plus double-buffered x/w tiles stay under ~32 MiB.
    M, K = x.shape
    _, N = w.shape
    tm = _tile(M, TM_TARGET)
    tk = _tile(K, TK_TARGET)
    return pl.pallas_call(
        _matmul_add_ln_kernel,
        out_shape=(jax.ShapeDtypeStruct((M, N), x.dtype),
                   jax.ShapeDtypeStruct((M, N), x.dtype)),
        grid=(M // tm, K // tk),
        in_specs=[pl.BlockSpec((tm, tk), lambda i, k: (i, k)),
                  pl.BlockSpec((tk, N), lambda i, k: (k, 0)),
                  pl.BlockSpec((tm, N), lambda i, k: (i, 0)),
                  pl.BlockSpec((1, N), lambda i, k: (0, 0))],
        out_specs=(pl.BlockSpec((tm, N), lambda i, k: (i, 0)),
                   pl.BlockSpec((tm, N), lambda i, k: (i, 0))),
        scratch_shapes=[pltpu.VMEM((tm, N), jnp.float32)],
        compiler_params=pltpu.CompilerParams(
            dimension_semantics=("parallel", "arbitrary"),
            vmem_limit_bytes=VMEM_LIMIT),
    )(x, w, residual, gamma.reshape(1, N))


# -------- flash attention (causal, GQA group folded into the Q block) --------
def _flash_attn_kernel(q_ref, k_ref, v_ref, o_ref, m_sc, l_sc, acc_sc,
                       *, rep, tq, tkv):
    qi = pl.program_id(2)
    ki = pl.program_id(3)

    @pl.when(ki == 0)
    def _():
        m_sc[...] = jnp.full_like(m_sc, -1e30)
        l_sc[...] = jnp.zeros_like(l_sc)
        acc_sc[...] = jnp.zeros_like(acc_sc)

    # Skip compute for KV blocks entirely in the causal future (the clamped
    # index_map already elided their DMA).
    @pl.when(ki <= qi)
    def _():
        dh = q_ref.shape[-1]
        q = q_ref[0]                                       # (rep, tq, Dh), pre-scaled
        k = jnp.broadcast_to(k_ref[0, 0], (rep, tkv, dh))  # shared K for the group
        v = jnp.broadcast_to(v_ref[0, 0], (rep, tkv, dh))
        s = jnp.einsum('rqd,rkd->rqk', q, k,
                       preferred_element_type=jnp.float32)  # (rep, tq, tkv)

        def update(scores):
            m_prev = m_sc[...]
            m_new = jnp.maximum(m_prev, jnp.max(scores, axis=-1, keepdims=True))
            alpha = jnp.exp(m_prev - m_new)
            p = jnp.exp(scores - m_new)
            l_sc[...] = alpha * l_sc[...] + jnp.sum(p, axis=-1, keepdims=True)
            acc_sc[...] = alpha * acc_sc[...] + jnp.einsum(
                'rqk,rkd->rqd', p.astype(v.dtype), v,
                preferred_element_type=jnp.float32)
            m_sc[...] = m_new

        # Causal mask is only needed on the diagonal block (tq == tkv, ki == qi).
        @pl.when(ki == qi)
        def _():
            row = lax.broadcasted_iota(jnp.int32, (tq, tkv), 0)
            col = lax.broadcasted_iota(jnp.int32, (tq, tkv), 1)
            update(jnp.where((col <= row)[None, :, :], s, -1e30))

        @pl.when(ki < qi)
        def _():
            update(s)

    @pl.when(ki == pl.num_programs(3) - 1)
    def _():
        inv = pl.reciprocal(l_sc[...], approx=True)
        o_ref[0] = (acc_sc[...] * inv).astype(o_ref.dtype)


def flash_attention(q, k, v):
    # q: (B, H, S, Dh) pre-scaled by 1/sqrt(Dh); k/v: (B, KV, S, Dh).
    B, H, S, Dh = q.shape
    KV = k.shape[1]
    rep = H // KV
    tq = _tile(S, SEQ_TILE)
    tkv = tq                        # causal DMA-elision clamp requires tq == tkv
    kern = functools.partial(_flash_attn_kernel, rep=rep, tq=tq, tkv=tkv)
    return pl.pallas_call(
        kern,
        out_shape=jax.ShapeDtypeStruct((B, H, S, Dh), q.dtype),
        grid=(B, KV, S // tq, S // tkv),
        in_specs=[
            pl.BlockSpec((1, rep, tq, Dh), lambda b, g, qi, ki: (b, g, qi, 0)),
            # clamp to the diagonal so fully-masked future blocks hit the
            # already-resident KV tile and the pipeline skips the DMA.
            pl.BlockSpec((1, 1, tkv, Dh),
                         lambda b, g, qi, ki: (b, g, jnp.minimum(ki, qi), 0)),
            pl.BlockSpec((1, 1, tkv, Dh),
                         lambda b, g, qi, ki: (b, g, jnp.minimum(ki, qi), 0)),
        ],
        out_specs=pl.BlockSpec((1, rep, tq, Dh),
                               lambda b, g, qi, ki: (b, g, qi, 0)),
        scratch_shapes=[pltpu.VMEM((rep, tq, 1), jnp.float32),
                        pltpu.VMEM((rep, tq, 1), jnp.float32),
                        pltpu.VMEM((rep, tq, Dh), jnp.float32)],
        compiler_params=pltpu.CompilerParams(
            dimension_semantics=("parallel", "parallel", "parallel", "arbitrary"),
            vmem_limit_bytes=VMEM_LIMIT),
    )(q, k, v)


# --------- MoE experts: chunked weight streaming, fused residual add ---------
def _moe_kernel(x_ref, w1_ref, w3_ref, w2_ref, gate_ref, res_ref, o_ref, acc_ref):
    e = pl.program_id(1)
    c = pl.program_id(2)

    @pl.when((e == 0) & (c == 0))
    def _():
        acc_ref[...] = jnp.zeros_like(acc_ref)

    x = x_ref[...]                                                   # (tt, D)
    g1 = jnp.dot(x, w1_ref[0], preferred_element_type=jnp.float32)   # (tt, ti)
    g3 = jnp.dot(x, w3_ref[0], preferred_element_type=jnp.float32)   # (tt, ti)
    h = (g1 * jax.nn.sigmoid(g1)) * g3                               # silu_and_mul
    part = jnp.dot(h.astype(x.dtype), w2_ref[0],
                   preferred_element_type=jnp.float32)               # (tt, D)
    acc_ref[...] += gate_ref[0] * part                               # gate: (tt, 1)

    @pl.when((e == pl.num_programs(1) - 1) & (c == pl.num_programs(2) - 1))
    def _():
        # fuse the block's final residual add into the MoE finalize
        o_ref[...] = (acc_ref[...] +
                      res_ref[...].astype(jnp.float32)).astype(o_ref.dtype)


def moe(x, w1, w3, w2, gates_etl, residual):
    T, D = x.shape
    E, _, inter = w1.shape
    tt = _tile(T, TOKEN_TILE)
    ti = _tile(inter, MOE_CHUNK)       # stream w1/w3 columns & w2 rows in chunks
    return pl.pallas_call(
        _moe_kernel,
        out_shape=jax.ShapeDtypeStruct((T, D), x.dtype),
        grid=(T // tt, E, inter // ti),
        in_specs=[pl.BlockSpec((tt, D), lambda t, e, c: (t, 0)),
                  pl.BlockSpec((1, D, ti), lambda t, e, c: (e, 0, c)),
                  pl.BlockSpec((1, D, ti), lambda t, e, c: (e, 0, c)),
                  pl.BlockSpec((1, ti, D), lambda t, e, c: (e, c, 0)),
                  pl.BlockSpec((1, tt, 1), lambda t, e, c: (e, t, 0)),
                  pl.BlockSpec((tt, D), lambda t, e, c: (t, 0))],
        out_specs=pl.BlockSpec((tt, D), lambda t, e, c: (t, 0)),
        scratch_shapes=[pltpu.VMEM((tt, D), jnp.float32)],
        compiler_params=pltpu.CompilerParams(
            dimension_semantics=("parallel", "arbitrary", "arbitrary"),
            vmem_limit_bytes=VMEM_LIMIT),
    )(x, w1, w3, w2, gates_etl, residual)


# ---------------- JAX glue ----------------
def apply_rope(q, k, positions, q_scale):
    # q: (B,S,H,Dh), k: (B,S,KV,Dh); positions: (B,S). NeoX-style rotary.
    # The 1/sqrt(head_dim) attention scale is folded into q here (fuses into
    # the elementwise rope chain; removes per-KV-step score scaling).
    half = HEAD_DIM // 2
    inv_freq = 1.0 / (ROPE_THETA ** (jnp.arange(half, dtype=jnp.float32) / half))
    freqs = positions.astype(jnp.float32)[:, :, None] * inv_freq[None, None, :]
    cos = jnp.cos(freqs)[:, :, None, :]
    sin = jnp.sin(freqs)[:, :, None, :]

    def rot(x, scale=1.0):
        xf = x.astype(jnp.float32)
        x1, x2 = xf[..., :half], xf[..., half:]
        out = jnp.concatenate([x1 * cos - x2 * sin, x2 * cos + x1 * sin], axis=-1)
        return (out * scale).astype(x.dtype)

    return rot(q, q_scale), rot(k)


def dbrx_block(params, positions, h):
    B, S, D = h.shape
    T = B * S
    x = h.reshape(T, D)

    # --- norm_attn_norm ---
    residual = x
    xn = layernorm(x, params["ln1_w"])

    qkv = linear(xn, params["wqkv_w"], clip=CLIP_QKV)      # clamp fused in kernel
    q_sz = N_HEADS * HEAD_DIM
    kv_sz = KV_HEADS * HEAD_DIM
    q = qkv[:, :q_sz].reshape(B, S, N_HEADS, HEAD_DIM)
    k = qkv[:, q_sz:q_sz + kv_sz].reshape(B, S, KV_HEADS, HEAD_DIM)
    v = qkv[:, q_sz + kv_sz:].reshape(B, S, KV_HEADS, HEAD_DIM)
    q, k = apply_rope(q, k, positions, q_scale=HEAD_DIM ** -0.5)

    # (B, H, S, Dh) layout; GQA group handled inside the attention kernel.
    q = q.transpose(0, 2, 1, 3)
    k = k.transpose(0, 2, 1, 3)
    v = v.transpose(0, 2, 1, 3)

    attn = flash_attention(q, k, v)                        # (B, H, S, Dh)
    attn = attn.transpose(0, 2, 1, 3).reshape(T, D)

    # out_proj + residual add + second LayerNorm fused in one kernel
    xn2, residual2 = linear_add_layernorm(attn, params["out_proj_w"],
                                          residual, params["ln2_w"])

    # --- MoE FFN (DbrxExperts, renormalize=True top-k gating) ---
    # Router in plain XLA (N_EXPERTS lanes are too narrow for a dense-lane
    # Pallas output); gates via compare-based one-hot instead of scatter.
    logits = jnp.dot(xn2.astype(jnp.float32),
                     params["router_w"].astype(jnp.float32))          # (T, E)
    probs = jax.nn.softmax(logits, axis=-1)
    topv, topi = lax.top_k(probs, TOP_K)
    topv = topv / jnp.sum(topv, axis=-1, keepdims=True)
    onehot = (topi[..., None] ==
              jnp.arange(N_EXPERTS)[None, None, :]).astype(jnp.float32)  # (T,K,E)
    gates = jnp.sum(onehot * topv[..., None], axis=1)                   # (T, E)
    gates_etl = gates.T[:, :, None]                                     # (E, T, 1)

    out = moe(xn2, params["w1"], params["w3"], params["w2"],
              gates_etl, residual2)                        # + residual fused
    return out.reshape(B, S, D)


def dbrx_model(params, input_ids, position_ids):
    h = jnp.take(params["wte"], input_ids, axis=0)                    # (B, S, D)
    for lp in params["blocks"]:
        h = dbrx_block(lp, position_ids, h)
    B, S, D = h.shape
    h = layernorm(h.reshape(B * S, D), params["norm_f_w"]).reshape(B, S, D)
    return h


# ---------------- deterministic parameter init ----------------
def init_params(key):
    def nrm(k, shape, scale=0.05):
        return (scale * jax.random.normal(k, shape, jnp.float32)).astype(DTYPE)

    keys = jax.random.split(key, 1 + N_LAYERS)
    params = {
        "wte": nrm(keys[0], (VOCAB, D_MODEL)),
        "norm_f_w": jnp.ones((D_MODEL,), jnp.float32),
        "blocks": [],
    }
    qkv_out = (N_HEADS + 2 * KV_HEADS) * HEAD_DIM
    for i in range(N_LAYERS):
        ks = jax.random.split(keys[1 + i], 6)
        params["blocks"].append({
            "ln1_w": jnp.ones((D_MODEL,), jnp.float32),
            "wqkv_w": nrm(ks[0], (D_MODEL, qkv_out)),
            "out_proj_w": nrm(ks[1], (D_MODEL, D_MODEL)),
            "ln2_w": jnp.ones((D_MODEL,), jnp.float32),
            "router_w": nrm(ks[2], (D_MODEL, N_EXPERTS)),
            # merged ws = [w1; v1] kept split so FFN-hidden chunks are
            # contiguous slabs (same math as the merged layout).
            "w1": nrm(ks[3], (N_EXPERTS, D_MODEL, FFN_HIDDEN)),
            "w3": nrm(ks[4], (N_EXPERTS, D_MODEL, FFN_HIDDEN)),
            "w2": nrm(ks[5], (N_EXPERTS, FFN_HIDDEN, D_MODEL)),
        })
    return params


if __name__ == "__main__":
    key = jax.random.PRNGKey(0)
    kp, kin = jax.random.split(key)
    params = init_params(kp)

    B, S = 2, 8
    input_ids = jax.random.randint(kin, (B, S), 0, VOCAB, dtype=jnp.int32)
    position_ids = jnp.broadcast_to(jnp.arange(S, dtype=jnp.int32), (B, S))

    out = jax.jit(dbrx_model)(params, input_ids, position_ids)
    jax.block_until_ready(out)

    assert out.shape == (B, S, D_MODEL)
    assert bool(jnp.all(jnp.isfinite(out.astype(jnp.float32))))
    print("KERNEL_OK")
</pallas_src>

<mosaic_0001>
module attributes {stable_mosaic.version = 11 : i64} {
  func.func @_matmul_kernel(%arg0: i32, %arg1: i32, %arg2: i32, %arg3: memref<16x32xbf16, #tpu.memory_space<vmem>>, %arg4: memref<32x64xbf16, #tpu.memory_space<vmem>>, %arg5: memref<16x64xbf16, #tpu.memory_space<vmem>>, %arg6: memref<16x64xf32, #tpu.memory_space<vmem>>) attributes {dimension_semantics = [#tpu.dimension_semantics<parallel>, #tpu.dimension_semantics<parallel>, #tpu.dimension_semantics<arbitrary>], iteration_bounds = array<i64: 1, 1, 1>, scalar_prefetch = 0 : i64, scratch_operands = 1 : i64, tpu.core_type = #tpu.core_type<tc>, window_params = [{transform_indices = @transform_0, window_bounds = array<i64: 16, 32>}, {transform_indices = @transform_1, window_bounds = array<i64: 32, 64>}, {transform_indices = @transform_2, window_bounds = array<i64: 16, 64>}]} {
    %c0_i32 = arith.constant 0 : i32
    %0 = arith.cmpi eq, %arg2, %c0_i32 : i32
    %1 = arith.extui %0 : i1 to i32
    %c0_i32_0 = arith.constant 0 : i32
    %2 = arith.cmpi ne, %1, %c0_i32_0 : i32
    scf.if %2 {
      %cst_10 = arith.constant 0.000000e+00 : f32
      %12 = vector.broadcast %cst_10 : f32 to vector<16x64xf32>
      %c0_11 = arith.constant 0 : index
      %c0_12 = arith.constant 0 : index
      %13 = vector.load %arg6[%c0_11, %c0_12] : memref<16x64xf32, #tpu.memory_space<vmem>>, vector<16x64xf32>
      tpu.vector_store %arg6[%c0_11, %c0_12], %12 {strides = array<i32>} : memref<16x64xf32, #tpu.memory_space<vmem>>, vector<16x64xf32>,
    } else {
    }
    %c0 = arith.constant 0 : index
    %c0_1 = arith.constant 0 : index
    %3 = vector.load %arg6[%c0, %c0_1] : memref<16x64xf32, #tpu.memory_space<vmem>>, vector<16x64xf32>
    %c0_2 = arith.constant 0 : index
    %c0_3 = arith.constant 0 : index
    %4 = vector.load %arg3[%c0_2, %c0_3] : memref<16x32xbf16, #tpu.memory_space<vmem>>, vector<16x32xbf16>
    %c0_4 = arith.constant 0 : index
    %c0_5 = arith.constant 0 : index
    %5 = vector.load %arg4[%c0_4, %c0_5] : memref<32x64xbf16, #tpu.memory_space<vmem>>, vector<32x64xbf16>
    %cst = arith.constant dense<0.000000e+00> : vector<16x64xf32>
    %6 = tpu.matmul %4, %5, %cst {dimension_numbers = #tpu.dot_dimension_numbers<[1], [0], [0], [1], [0, 0, 1, 1], [], []>} : vector<16x32xbf16>, vector<32x64xbf16>, vector<16x64xf32> -> vector<16x64xf32>
    %7 = arith.addf %3, %6 : vector<16x64xf32>
    %c0_6 = arith.constant 0 : index
    %c0_7 = arith.constant 0 : index
    %8 = vector.load %arg6[%c0_6, %c0_7] : memref<16x64xf32, #tpu.memory_space<vmem>>, vector<16x64xf32>
    tpu.vector_store %arg6[%c0_6, %c0_7], %7 {strides = array<i32>} : memref<16x64xf32, #tpu.memory_space<vmem>>, vector<16x64xf32>,
    %c0_i32_8 = arith.constant 0 : i32
    %9 = arith.cmpi eq, %arg2, %c0_i32_8 : i32
    %10 = arith.extui %9 : i1 to i32
    %c0_i32_9 = arith.constant 0 : i32
    %11 = arith.cmpi ne, %10, %c0_i32_9 : i32
    scf.if %11 {
      %c0_10 = arith.constant 0 : index
      %c0_11 = arith.constant 0 : index
      %12 = vector.load %arg6[%c0_10, %c0_11] : memref<16x64xf32, #tpu.memory_space<vmem>>, vector<16x64xf32>
      %cst_12 = arith.constant -8.000000e+00 : f32
      %cst_13 = arith.constant 8.000000e+00 : f32
      %13 = vector.broadcast %cst_12 : f32 to vector<16x64xf32>
      %14 = arith.maximumf %13, %12 : vector<16x64xf32>
      %15 = vector.broadcast %cst_13 : f32 to vector<16x64xf32>
      %16 = arith.minimumf %15, %14 : vector<16x64xf32>
      %17 = arith.truncf %16 : vector<16x64xf32> to vector<16x64xbf16>
      %c0_14 = arith.constant 0 : index
      %c0_15 = arith.constant 0 : index
      %18 = vector.load %arg5[%c0_14, %c0_15] : memref<16x64xbf16, #tpu.memory_space<vmem>>, vector<16x64xbf16>
      tpu.vector_store %arg5[%c0_14, %c0_15], %17 {strides = array<i32>} : memref<16x64xbf16, #tpu.memory_space<vmem>>, vector<16x64xbf16>,
    } else {
    }
    return
  }
  func.func @transform_0(%arg0: i32, %arg1: i32, %arg2: i32) -> (i32, i32) {
    %c0_i32 = arith.constant 0 : i32
    return %arg0, %arg2 : i32, i32
  }
  func.func @transform_1(%arg0: i32, %arg1: i32, %arg2: i32) -> (i32, i32) {
    %c0_i32 = arith.constant 0 : i32
    return %arg2, %arg1 : i32, i32
  }
  func.func @transform_2(%arg0: i32, %arg1: i32, %arg2: i32) -> (i32, i32) {
    %c0_i32 = arith.constant 0 : i32
    return %arg0, %arg1 : i32, i32
  }
}

module attributes {stable_mosaic.version = 11 : i64} {
  func.func @_ln_kernel(%arg0: i32, %arg1: memref<16x32xbf16, #tpu.memory_space<vmem>>, %arg2: memref<1x32xf32, #tpu.memory_space<vmem>>, %arg3: memref<16x32xbf16, #tpu.memory_space<vmem>>) attributes {dimension_semantics = [#tpu.dimension_semantics<parallel>], iteration_bounds = array<i64: 1>, scalar_prefetch = 0 : i64, scratch_operands = 0 : i64, tpu.core_type = #tpu.core_type<tc>, window_params = [{transform_indices = @transform_0, window_bounds = array<i64: 16, 32>}, {pipeline_mode = #tpu.pipeline_mode<synchronous>, transform_indices = @transform_1, window_bounds = array<i64: 1, 32>}, {transform_indices = @transform_2, window_bounds = array<i64: 16, 32>}]} {
    %c0 = arith.constant 0 : index
    %c0_0 = arith.constant 0 : index
    %0 = vector.load %arg1[%c0, %c0_0] : memref<16x32xbf16, #tpu.memory_space<vmem>>, vector<16x32xbf16>
    %1 = arith.extf %0 : vector<16x32xbf16> to vector<16x32xf32>
    %cst = arith.constant dense<0.000000e+00> : vector<16xf32>
    %2 = vector.multi_reduction <add>, %1, %cst [1] : vector<16x32xf32> to vector<16xf32>
    %3 = vector.shape_cast %2 : vector<16xf32> to vector<16x1xf32>
    %cst_1 = arith.constant 3.200000e+01 : f32
    %4 = vector.broadcast %cst_1 : f32 to vector<16x1xf32>
    %5 = arith.divf %3, %4 : vector<16x1xf32>
    %6 = vector.broadcast %5 : vector<16x1xf32> to vector<16x32xf32>
    %7 = arith.subf %1, %6 : vector<16x32xf32>
    %8 = arith.mulf %7, %7 : vector<16x32xf32>
    %cst_2 = arith.constant dense<0.000000e+00> : vector<16xf32>
    %9 = vector.multi_reduction <add>, %8, %cst_2 [1] : vector<16x32xf32> to vector<16xf32>
    %10 = vector.shape_cast %9 : vector<16xf32> to vector<16x1xf32>
    %cst_3 = arith.constant 3.200000e+01 : f32
    %11 = vector.broadcast %cst_3 : f32 to vector<16x1xf32>
    %12 = arith.divf %10, %11 : vector<16x1xf32>
    %cst_4 = arith.constant 9.99999974E-6 : f32
    %13 = vector.broadcast %cst_4 : f32 to vector<16x1xf32>
    %14 = arith.addf %12, %13 : vector<16x1xf32>
    %15 = math.rsqrt %14 : vector<16x1xf32>
    %16 = vector.broadcast %15 : vector<16x1xf32> to vector<16x32xf32>
    %17 = arith.mulf %7, %16 : vector<16x32xf32>
    %c0_5 = arith.constant 0 : index
    %c0_6 = arith.constant 0 : index
    %18 = vector.load %arg2[%c0_5, %c0_6] : memref<1x32xf32, #tpu.memory_space<vmem>>, vector<1x32xf32>
    %19 = vector.broadcast %18 : vector<1x32xf32> to vector<16x32xf32>
    %20 = arith.mulf %17, %19 : vector<16x32xf32>
    %21 = arith.truncf %20 : vector<16x32xf32> to vector<16x32xbf16>
    %c0_7 = arith.constant 0 : index
    %c0_8 = arith.constant 0 : index
    %22 = vector.load %arg3[%c0_7, %c0_8] : memref<16x32xbf16, #tpu.memory_space<vmem>>, vector<16x32xbf16>
    tpu.vector_store %arg3[%c0_7, %c0_8], %21 {strides = array<i32>} : memref<16x32xbf16, #tpu.memory_space<vmem>>, vector<16x32xbf16>,
    return
  }
  func.func @transform_0(%arg0: i32) -> (i32, i32) {
    %c0_i32 = arith.constant 0 : i32
    %c0_i32_0 = arith.constant 0 : i32
    return %arg0, %c0_i32 : i32, i32
  }
  func.func @transform_1(%arg0: i32) -> (i32, i32) {
    %c0_i32 = arith.constant 0 : i32
    %c0_i32_0 = arith.constant 0 : i32
    %c0_i32_1 = arith.constant 0 : i32
    return %c0_i32, %c0_i32_0 : i32, i32
  }
  func.func @transform_2(%arg0: i32) -> (i32, i32) {
    %c0_i32 = arith.constant 0 : i32
    %c0_i32_0 = arith.constant 0 : i32
    return %arg0, %c0_i32 : i32, i32
  }
}

module attributes {stable_mosaic.version = 11 : i64} {
  func.func @_flash_attn_kernel(%arg0: i32, %arg1: i32, %arg2: i32, %arg3: i32, %arg4: memref<1x2x8x8xbf16, #tpu.memory_space<vmem>>, %arg5: memref<1x1x8x8xbf16, #tpu.memory_space<vmem>>, %arg6: memref<1x1x8x8xbf16, #tpu.memory_space<vmem>>, %arg7: memref<1x2x8x8xbf16, #tpu.memory_space<vmem>>, %arg8: memref<2x8x1xf32, #tpu.memory_space<vmem>>, %arg9: memref<2x8x1xf32, #tpu.memory_space<vmem>>, %arg10: memref<2x8x8xf32, #tpu.memory_space<vmem>>) attributes {dimension_semantics = [#tpu.dimension_semantics<parallel>, #tpu.dimension_semantics<parallel>, #tpu.dimension_semantics<parallel>, #tpu.dimension_semantics<arbitrary>], iteration_bounds = array<i64: 2, 2, 1, 1>, scalar_prefetch = 0 : i64, scratch_operands = 3 : i64, tpu.core_type = #tpu.core_type<tc>, window_params = [{transform_indices = @transform_0, window_bounds = array<i64: 1, 2, 8, 8>}, {transform_indices = @transform_1, window_bounds = array<i64: 1, 1, 8, 8>}, {transform_indices = @transform_2, window_bounds = array<i64: 1, 1, 8, 8>}, {transform_indices = @transform_3, window_bounds = array<i64: 1, 2, 8, 8>}]} {
    %c0_i32 = arith.constant 0 : i32
    %0 = arith.cmpi eq, %arg3, %c0_i32 : i32
    %1 = arith.extui %0 : i1 to i32
    %c0_i32_0 = arith.constant 0 : i32
    %2 = arith.cmpi ne, %1, %c0_i32_0 : i32
    scf.if %2 {
      %cst = arith.constant -1.000000e+30 : f32
      %9 = vector.broadcast %cst : f32 to vector<2x8x1xf32>
      %c0 = arith.constant 0 : index
      %c0_4 = arith.constant 0 : index
      %c0_5 = arith.constant 0 : index
      %10 = vector.load %arg8[%c0, %c0_4, %c0_5] : memref<2x8x1xf32, #tpu.memory_space<vmem>>, vector<2x8x1xf32>
      tpu.vector_store %arg8[%c0, %c0_4, %c0_5], %9 {strides = array<i32>} : memref<2x8x1xf32, #tpu.memory_space<vmem>>, vector<2x8x1xf32>,
      %cst_6 = arith.constant 0.000000e+00 : f32
      %11 = vector.broadcast %cst_6 : f32 to vector<2x8x1xf32>
      %c0_7 = arith.constant 0 : index
      %c0_8 = arith.constant 0 : index
      %c0_9 = arith.constant 0 : index
      %12 = vector.load %arg9[%c0_7, %c0_8, %c0_9] : memref<2x8x1xf32, #tpu.memory_space<vmem>>, vector<2x8x1xf32>
      tpu.vector_store %arg9[%c0_7, %c0_8, %c0_9], %11 {strides = array<i32>} : memref<2x8x1xf32, #tpu.memory_space<vmem>>, vector<2x8x1xf32>,
      %cst_10 = arith.constant 0.000000e+00 : f32
      %13 = vector.broadcast %cst_10 : f32 to vector<2x8x8xf32>
      %c0_11 = arith.constant 0 : index
      %c0_12 = arith.constant 0 : index
      %c0_13 = arith.constant 0 : index
      %14 = vector.load %arg10[%c0_11, %c0_12, %c0_13] : memref<2x8x8xf32, #tpu.memory_space<vmem>>, vector<2x8x8xf32>
      tpu.vector_store %arg10[%c0_11, %c0_12, %c0_13], %13 {strides = array<i32>} : memref<2x8x8xf32, #tpu.memory_space<vmem>>, vector<2x8x8xf32>,
    } else {
    }
    %3 = arith.cmpi sle, %arg3, %arg2 : i32
    %4 = arith.extui %3 : i1 to i32
    %c0_i32_1 = arith.constant 0 : i32
    %5 = arith.cmpi ne, %4, %c0_i32_1 : i32
    scf.if %5 {
      %c0 = arith.constant 0 : index
      %c0_4 = arith.constant 0 : index
      %c0_5 = arith.constant 0 : index
      %c0_6 = arith.constant 0 : index
      %9 = vector.load %arg4[%c0, %c0_4, %c0_5, %c0_6] : memref<1x2x8x8xbf16, #tpu.memory_space<vmem>>, vector<1x2x8x8xbf16>
      %10 = vector.shape_cast %9 : vector<1x2x8x8xbf16> to vector<2x8x8xbf16>
      %c0_7 = arith.constant 0 : index
      %c0_8 = arith.constant 0 : index
      %c0_9 = arith.constant 0 : index
      %c0_10 = arith.constant 0 : index
      %11 = vector.load %arg5[%c0_7, %c0_8, %c0_9, %c0_10] : memref<1x1x8x8xbf16, #tpu.memory_space<vmem>>, vector<1x1x8x8xbf16>
      %12 = vector.shape_cast %11 : vector<1x1x8x8xbf16> to vector<8x8xbf16>
      %13 = vector.shape_cast %12 : vector<8x8xbf16> to vector<1x8x8xbf16>
      %14 = vector.broadcast %13 : vector<1x8x8xbf16> to vector<2x8x8xbf16>
      %c0_11 = arith.constant 0 : index
      %c0_12 = arith.constant 0 : index
      %c0_13 = arith.constant 0 : index
      %c0_14 = arith.constant 0 : index
      %15 = vector.load %arg6[%c0_11, %c0_12, %c0_13, %c0_14] : memref<1x1x8x8xbf16, #tpu.memory_space<vmem>>, vector<1x1x8x8xbf16>
      %16 = vector.shape_cast %15 : vector<1x1x8x8xbf16> to vector<8x8xbf16>
      %17 = vector.shape_cast %16 : vector<8x8xbf16> to vector<1x8x8xbf16>
      %18 = vector.broadcast %17 : vector<1x8x8xbf16> to vector<2x8x8xbf16>
      "tpu.trace_start"() <{level = 10 : i32, message = "rqd,rkd->rqk"}> : () -> ()
      %cst = arith.constant dense<0.000000e+00> : vector<2x8x8xf32>
      %19 = tpu.matmul %10, %14, %cst {dimension_numbers = #tpu.dot_dimension_numbers<[2], [2], [1], [1], [0, 0, 0, 1, 1, 1], [0], [0]>} : vector<2x8x8xbf16>, vector<2x8x8xbf16>, vector<2x8x8xf32> -> vector<2x8x8xf32>
      "tpu.trace_stop"() : () -> ()
      %20 = arith.cmpi eq, %arg3, %arg2 : i32
      %21 = arith.extui %20 : i1 to i32
      %c0_i32_15 = arith.constant 0 : i32
      %22 = arith.cmpi ne, %21, %c0_i32_15 : i32
      scf.if %22 {
        %26 = tpu.iota {dimensions = array<i32: 0>} : vector<8x8xi32>
        %27 = tpu.iota {dimensions = array<i32: 1>} : vector<8x8xi32>
        %28 = arith.cmpi sle, %27, %26 : vector<8x8xi32>
        %29 = vector.shape_cast %28 : vector<8x8xi1> to vector<1x8x8xi1>
        %cst_17 = arith.constant -1.000000e+30 : f32
        %30 = vector.shape_cast %29 : vector<1x8x8xi1> to vector<1x8x8xi1>
        %31 = vector.broadcast %30 : vector<1x8x8xi1> to vector<2x8x8xi1>
        %32 = vector.broadcast %cst_17 : f32 to vector<2x8x8xf32>
        %33 = arith.select %31, %19, %32 : vector<2x8x8xi1>, vector<2x8x8xf32>
        %c0_18 = arith.constant 0 : index
        %c0_19 = arith.constant 0 : index
        %c0_20 = arith.constant 0 : index
        %34 = vector.load %arg8[%c0_18, %c0_19, %c0_20] : memref<2x8x1xf32, #tpu.memory_space<vmem>>, vector<2x8x1xf32>
        %cst_21 = arith.constant dense<0xFF800000> : vector<2x8xf32>
        %35 = vector.multi_reduction <maximumf>, %33, %cst_21 [2] : vector<2x8x8xf32> to vector<2x8xf32>
        %36 = vector.shape_cast %35 : vector<2x8xf32> to vector<2x8x1xf32>
        %37 = arith.maximumf %34, %36 : vector<2x8x1xf32>
        %38 = arith.subf %34, %37 : vector<2x8x1xf32>
        %39 = math.exp %38 : vector<2x8x1xf32>
        %40 = vector.broadcast %37 : vector<2x8x1xf32> to vector<2x8x8xf32>
        %41 = arith.subf %33, %40 : vector<2x8x8xf32>
        %42 = math.exp %41 : vector<2x8x8xf32>
        %c0_22 = arith.constant 0 : index
        %c0_23 = arith.constant 0 : index
        %c0_24 = arith.constant 0 : index
        %43 = vector.load %arg9[%c0_22, %c0_23, %c0_24] : memref<2x8x1xf32, #tpu.memory_space<vmem>>, vector<2x8x1xf32>
        %44 = arith.mulf %39, %43 : vector<2x8x1xf32>
        %cst_25 = arith.constant dense<0.000000e+00> : vector<2x8xf32>
        %45 = vector.multi_reduction <add>, %42, %cst_25 [2] : vector<2x8x8xf32> to vector<2x8xf32>
        %46 = vector.shape_cast %45 : vector<2x8xf32> to vector<2x8x1xf32>
        %47 = arith.addf %44, %46 : vector<2x8x1xf32>
        %c0_26 = arith.constant 0 : index
        %c0_27 = arith.constant 0 : index
        %c0_28 = arith.constant 0 : index
        %48 = vector.load %arg9[%c0_26, %c0_27, %c0_28] : memref<2x8x1xf32, #tpu.memory_space<vmem>>, vector<2x8x1xf32>
        tpu.vector_store %arg9[%c0_26, %c0_27, %c0_28], %47 {strides = array<i32>} : memref<2x8x1xf32, #tpu.memory_space<vmem>>, vector<2x8x1xf32>,
        %c0_29 = arith.constant 0 : index
        %c0_30 = arith.constant 0 : index
        %c0_31 = arith.constant 0 : index
        %49 = vector.load %arg10[%c0_29, %c0_30, %c0_31] : memref<2x8x8xf32, #tpu.memory_space<vmem>>, vector<2x8x8xf32>
        %50 = vector.broadcast %39 : vector<2x8x1xf32> to vector<2x8x8xf32>
        %51 = arith.mulf %50, %49 : vector<2x8x8xf32>
        %52 = arith.truncf %42 : vector<2x8x8xf32> to vector<2x8x8xbf16>
        "tpu.trace_start"() <{level = 10 : i32, message = "rqk,rkd->rqd"}> : () -> ()
        %cst_32 = arith.constant dense<0.000000e+00> : vector<2x8x8xf32>
        %53 = tpu.matmul %52, %18, %cst_32 {dimension_numbers = #tpu.dot_dimension_numbers<[2], [1], [1], [2], [0, 0, 0, 1, 1, 2], [0], [0]>} : vector<2x8x8xbf16>, vector<2x8x8xbf16>, vector<2x8x8xf32> -> vector<2x8x8xf32>
        "tpu.trace_stop"() : () -> ()
        %54 = arith.addf %51, %53 : vector<2x8x8xf32>
        %c0_33 = arith.constant 0 : index
        %c0_34 = arith.constant 0 : index
        %c0_35 = arith.constant 0 : index
        %55 = vector.load %arg10[%c0_33, %c0_34, %c0_35] : memref<2x8x8xf32, #tpu.memory_space<vmem>>, vector<2x8x8xf32>
        tpu.vector_store %arg10[%c0_33, %c0_34, %c0_35], %54 {strides = array<i32>} : memref<2x8x8xf32, #tpu.memory_space<vmem>>, vector<2x8x8xf32>,
        %c0_36 = arith.constant 0 : index
        %c0_37 = arith.constant 0 : index
        %c0_38 = arith.constant 0 : index
        %56 = vector.load %arg8[%c0_36, %c0_37, %c0_38] : memref<2x8x1xf32, #tpu.memory_space<vmem>>, vector<2x8x1xf32>
        tpu.vector_store %arg8[%c0_36, %c0_37, %c0_38], %37 {strides = array<i32>} : memref<2x8x1xf32, #tpu.memory_space<vmem>>, vector<2x8x1xf32>,
      } else {
      }
      %23 = arith.cmpi slt, %arg3, %arg2 : i32
      %24 = arith.extui %23 : i1 to i32
      %c0_i32_16 = arith.constant 0 : i32
      %25 = arith.cmpi ne, %24, %c0_i32_16 : i32
      scf.if %25 {
        %c0_17 = arith.constant 0 : index
        %c0_18 = arith.constant 0 : index
        %c0_19 = arith.constant 0 : index
        %26 = vector.load %arg8[%c0_17, %c0_18, %c0_19] : memref<2x8x1xf32, #tpu.memory_space<vmem>>, vector<2x8x1xf32>
        %cst_20 = arith.constant dense<0xFF800000> : vector<2x8xf32>
        %27 = vector.multi_reduction <maximumf>, %19, %cst_20 [2] : vector<2x8x8xf32> to vector<2x8xf32>
        %28 = vector.shape_cast %27 : vector<2x8xf32> to vector<2x8x1xf32>
        %29 = arith.maximumf %26, %28 : vector<2x8x1xf32>
        %30 = arith.subf %26, %29 : vector<2x8x1xf32>
        %31 = math.exp %30 : vector<2x8x1xf32>
        %32 = vector.broadcast %29 : vector<2x8x1xf32> to vector<2x8x8xf32>
        %33 = arith.subf %19, %32 : vector<2x8x8xf32>
        %34 = math.exp %33 : vector<2x8x8xf32>
        %c0_21 = arith.constant 0 : index
        %c0_22 = arith.constant 0 : index
        %c0_23 = arith.constant 0 : index
        %35 = vector.load %arg9[%c0_21, %c0_22, %c0_23] : memref<2x8x1xf32, #tpu.memory_space<vmem>>, vector<2x8x1xf32>
        %36 = arith.mulf %31, %35 : vector<2x8x1xf32>
        %cst_24 = arith.constant dense<0.000000e+00> : vector<2x8xf32>
        %37 = vector.multi_reduction <add>, %34, %cst_24 [2] : vector<2x8x8xf32> to vector<2x8xf32>
        %38 = vector.shape_cast %37 : vector<2x8xf32> to vector<2x8x1xf32>
        %39 = arith.addf %36, %38 : vector<2x8x1xf32>
        %c0_25 = arith.constant 0 : index
        %c0_26 = arith.constant 0 : index
        %c0_27 = arith.constant 0 : index
        %40 = vector.load %arg9[%c0_25, %c0_26, %c0_27] : memref<2x8x1xf32, #tpu.memory_space<vmem>>, vector<2x8x1xf32>
        tpu.vector_store %arg9[%c0_25, %c0_26, %c0_27], %39 {strides = array<i32>} : memref<2x8x1xf32, #tpu.memory_space<vmem>>, vector<2x8x1xf32>,
        %c0_28 = arith.constant 0 : index
        %c0_29 = arith.constant 0 : index
        %c0_30 = arith.constant 0 : index
        %41 = vector.load %arg10[%c0_28, %c0_29, %c0_30] : memref<2x8x8xf32, #tpu.memory_space<vmem>>, vector<2x8x8xf32>
        %42 = vector.broadcast %31 : vector<2x8x1xf32> to vector<2x8x8xf32>
        %43 = arith.mulf %42, %41 : vector<2x8x8xf32>
        %44 = arith.truncf %34 : vector<2x8x8xf32> to vector<2x8x8xbf16>
        "tpu.trace_start"() <{level = 10 : i32, message = "rqk,rkd->rqd"}> : () -> ()
        %cst_31 = arith.constant dense<0.000000e+00> : vector<2x8x8xf32>
        %45 = tpu.matmul %44, %18, %cst_31 {dimension_numbers = #tpu.dot_dimension_numbers<[2], [1], [1], [2], [0, 0, 0, 1, 1, 2], [0], [0]>} : vector<2x8x8xbf16>, vector<2x8x8xbf16>, vector<2x8x8xf32> -> vector<2x8x8xf32>
        "tpu.trace_stop"() : () -> ()
        %46 = arith.addf %43, %45 : vector<2x8x8xf32>
        %c0_32 = arith.constant 0 : index
        %c0_33 = arith.constant 0 : index
        %c0_34 = arith.constant 0 : index
        %47 = vector.load %arg10[%c0_32, %c0_33, %c0_34] : memref<2x8x8xf32, #tpu.memory_space<vmem>>, vector<2x8x8xf32>
        tpu.vector_store %arg10[%c0_32, %c0_33, %c0_34], %46 {strides = array<i32>} : memref<2x8x8xf32, #tpu.memory_space<vmem>>, vector<2x8x8xf32>,
        %c0_35 = arith.constant 0 : index
        %c0_36 = arith.constant 0 : index
        %c0_37 = arith.constant 0 : index
        %48 = vector.load %arg8[%c0_35, %c0_36, %c0_37] : memref<2x8x1xf32, #tpu.memory_space<vmem>>, vector<2x8x1xf32>
        tpu.vector_store %arg8[%c0_35, %c0_36, %c0_37], %29 {strides = array<i32>} : memref<2x8x1xf32, #tpu.memory_space<vmem>>, vector<2x8x1xf32>,
      } else {
      }
    } else {
    }
    %c0_i32_2 = arith.constant 0 : i32
    %6 = arith.cmpi eq, %arg3, %c0_i32_2 : i32
    %7 = arith.extui %6 : i1 to i32
    %c0_i32_3 = arith.constant 0 : i32
    %8 = arith.cmpi ne, %7, %c0_i32_3 : i32
    scf.if %8 {
      %c0 = arith.constant 0 : index
      %c0_4 = arith.constant 0 : index
      %c0_5 = arith.constant 0 : index
      %9 = vector.load %arg9[%c0, %c0_4, %c0_5] : memref<2x8x1xf32, #tpu.memory_space<vmem>>, vector<2x8x1xf32>
      %10 = tpu.reciprocal %9 {approx = true} : vector<2x8x1xf32> -> vector<2x8x1xf32>
      %c0_6 = arith.constant 0 : index
      %c0_7 = arith.constant 0 : index
      %c0_8 = arith.constant 0 : index
      %11 = vector.load %arg10[%c0_6, %c0_7, %c0_8] : memref<2x8x8xf32, #tpu.memory_space<vmem>>, vector<2x8x8xf32>
      %12 = vector.broadcast %10 : vector<2x8x1xf32> to vector<2x8x8xf32>
      %13 = arith.mulf %11, %12 : vector<2x8x8xf32>
      %14 = arith.truncf %13 : vector<2x8x8xf32> to vector<2x8x8xbf16>
      %c0_9 = arith.constant 0 : index
      %c0_10 = arith.constant 0 : index
      %c0_11 = arith.constant 0 : index
      %c0_12 = arith.constant 0 : index
      %15 = vector.load %arg7[%c0_9, %c0_10, %c0_11, %c0_12] : memref<1x2x8x8xbf16, #tpu.memory_space<vmem>>, vector<1x2x8x8xbf16>
      %16 = vector.shape_cast %15 : vector<1x2x8x8xbf16> to vector<2x8x8xbf16>
      %17 = vector.shape_cast %14 : vector<2x8x8xbf16> to vector<1x2x8x8xbf16>
      tpu.vector_store %arg7[%c0_9, %c0_10, %c0_11, %c0_12], %17 {strides = array<i32>} : memref<1x2x8x8xbf16, #tpu.memory_space<vmem>>, vector<1x2x8x8xbf16>,
    } else {
    }
    return
  }
  func.func @transform_0(%arg0: i32, %arg1: i32, %arg2: i32, %arg3: i32) -> (i32, i32, i32, i32) {
    %c0_i32 = arith.constant 0 : i32
    %c0_i32_0 = arith.constant 0 : i32
    return %arg0, %arg1, %arg2, %c0_i32 : i32, i32, i32, i32
  }
  func.func @transform_1(%arg0: i32, %arg1: i32, %arg2: i32, %arg3: i32) -> (i32, i32, i32, i32) {
    %0 = arith.minsi %arg3, %arg2 : i32
    %c0_i32 = arith.constant 0 : i32
    %c0_i32_0 = arith.constant 0 : i32
    return %arg0, %arg1, %0, %c0_i32 : i32, i32, i32, i32
  }
  func.func @transform_2(%arg0: i32, %arg1: i32, %arg2: i32, %arg3: i32) -> (i32, i32, i32, i32) {
    %0 = arith.minsi %arg3, %arg2 : i32
    %c0_i32 = arith.constant 0 : i32
    %c0_i32_0 = arith.constant 0 : i32
    return %arg0, %arg1, %0, %c0_i32 : i32, i32, i32, i32
  }
  func.func @transform_3(%arg0: i32, %arg1: i32, %arg2: i32, %arg3: i32) -> (i32, i32, i32, i32) {
    %c0_i32 = arith.constant 0 : i32
    %c0_i32_0 = arith.constant 0 : i32
    return %arg0, %arg1, %arg2, %c0_i32 : i32, i32, i32, i32
  }
}

module attributes {stable_mosaic.version = 11 : i64} {
  func.func @_matmul_add_ln_kernel(%arg0: i32, %arg1: i32, %arg2: memref<16x32xbf16, #tpu.memory_space<vmem>>, %arg3: memref<32x32xbf16, #tpu.memory_space<vmem>>, %arg4: memref<16x32xbf16, #tpu.memory_space<vmem>>, %arg5: memref<1x32xf32, #tpu.memory_space<vmem>>, %arg6: memref<16x32xbf16, #tpu.memory_space<vmem>>, %arg7: memref<16x32xbf16, #tpu.memory_space<vmem>>, %arg8: memref<16x32xf32, #tpu.memory_space<vmem>>) attributes {dimension_semantics = [#tpu.dimension_semantics<parallel>, #tpu.dimension_semantics<arbitrary>], iteration_bounds = array<i64: 1, 1>, scalar_prefetch = 0 : i64, scratch_operands = 1 : i64, tpu.core_type = #tpu.core_type<tc>, window_params = [{transform_indices = @transform_0, window_bounds = array<i64: 16, 32>}, {transform_indices = @transform_1, window_bounds = array<i64: 32, 32>}, {transform_indices = @transform_2, window_bounds = array<i64: 16, 32>}, {pipeline_mode = #tpu.pipeline_mode<synchronous>, transform_indices = @transform_3, window_bounds = array<i64: 1, 32>}, {transform_indices = @transform_4, window_bounds = array<i64: 16, 32>}, {transform_indices = @transform_5, window_bounds = array<i64: 16, 32>}]} {
    %c0_i32 = arith.constant 0 : i32
    %0 = arith.cmpi eq, %arg1, %c0_i32 : i32
    %1 = arith.extui %0 : i1 to i32
    %c0_i32_0 = arith.constant 0 : i32
    %2 = arith.cmpi ne, %1, %c0_i32_0 : i32
    scf.if %2 {
      %cst_10 = arith.constant 0.000000e+00 : f32
      %12 = vector.broadcast %cst_10 : f32 to vector<16x32xf32>
      %c0_11 = arith.constant 0 : index
      %c0_12 = arith.constant 0 : index
      %13 = vector.load %arg8[%c0_11, %c0_12] : memref<16x32xf32, #tpu.memory_space<vmem>>, vector<16x32xf32>
      tpu.vector_store %arg8[%c0_11, %c0_12], %12 {strides = array<i32>} : memref<16x32xf32, #tpu.memory_space<vmem>>, vector<16x32xf32>,
    } else {
    }
    %c0 = arith.constant 0 : index
    %c0_1 = arith.constant 0 : index
    %3 = vector.load %arg8[%c0, %c0_1] : memref<16x32xf32, #tpu.memory_space<vmem>>, vector<16x32xf32>
    %c0_2 = arith.constant 0 : index
    %c0_3 = arith.constant 0 : index
    %4 = vector.load %arg2[%c0_2, %c0_3] : memref<16x32xbf16, #tpu.memory_space<vmem>>, vector<16x32xbf16>
    %c0_4 = arith.constant 0 : index
    %c0_5 = arith.constant 0 : index
    %5 = vector.load %arg3[%c0_4, %c0_5] : memref<32x32xbf16, #tpu.memory_space<vmem>>, vector<32x32xbf16>
    %cst = arith.constant dense<0.000000e+00> : vector<16x32xf32>
    %6 = tpu.matmul %4, %5, %cst {dimension_numbers = #tpu.dot_dimension_numbers<[1], [0], [0], [1], [0, 0, 1, 1], [], []>} : vector<16x32xbf16>, vector<32x32xbf16>, vector<16x32xf32> -> vector<16x32xf32>
    %7 = arith.addf %3, %6 : vector<16x32xf32>
    %c0_6 = arith.constant 0 : index
    %c0_7 = arith.constant 0 : index
    %8 = vector.load %arg8[%c0_6, %c0_7] : memref<16x32xf32, #tpu.memory_space<vmem>>, vector<16x32xf32>
    tpu.vector_store %arg8[%c0_6, %c0_7], %7 {strides = array<i32>} : memref<16x32xf32, #tpu.memory_space<vmem>>, vector<16x32xf32>,
    %c0_i32_8 = arith.constant 0 : i32
    %9 = arith.cmpi eq, %arg1, %c0_i32_8 : i32
    %10 = arith.extui %9 : i1 to i32
    %c0_i32_9 = arith.constant 0 : i32
    %11 = arith.cmpi ne, %10, %c0_i32_9 : i32
    scf.if %11 {
      %c0_10 = arith.constant 0 : index
      %c0_11 = arith.constant 0 : index
      %12 = vector.load %arg8[%c0_10, %c0_11] : memref<16x32xf32, #tpu.memory_space<vmem>>, vector<16x32xf32>
      %c0_12 = arith.constant 0 : index
      %c0_13 = arith.constant 0 : index
      %13 = vector.load %arg4[%c0_12, %c0_13] : memref<16x32xbf16, #tpu.memory_space<vmem>>, vector<16x32xbf16>
      %14 = arith.extf %13 : vector<16x32xbf16> to vector<16x32xf32>
      %15 = arith.addf %12, %14 : vector<16x32xf32>
      %cst_14 = arith.constant dense<0.000000e+00> : vector<16xf32>
      %16 = vector.multi_reduction <add>, %15, %cst_14 [1] : vector<16x32xf32> to vector<16xf32>
      %17 = vector.shape_cast %16 : vector<16xf32> to vector<16x1xf32>
      %cst_15 = arith.constant 3.200000e+01 : f32
      %18 = vector.broadcast %cst_15 : f32 to vector<16x1xf32>
      %19 = arith.divf %17, %18 : vector<16x1xf32>
      %20 = vector.broadcast %19 : vector<16x1xf32> to vector<16x32xf32>
      %21 = arith.subf %15, %20 : vector<16x32xf32>
      %22 = arith.mulf %21, %21 : vector<16x32xf32>
      %cst_16 = arith.constant dense<0.000000e+00> : vector<16xf32>
      %23 = vector.multi_reduction <add>, %22, %cst_16 [1] : vector<16x32xf32> to vector<16xf32>
      %24 = vector.shape_cast %23 : vector<16xf32> to vector<16x1xf32>
      %cst_17 = arith.constant 3.200000e+01 : f32
      %25 = vector.broadcast %cst_17 : f32 to vector<16x1xf32>
      %26 = arith.divf %24, %25 : vector<16x1xf32>
      %cst_18 = arith.constant 9.99999974E-6 : f32
      %27 = vector.broadcast %cst_18 : f32 to vector<16x1xf32>
      %28 = arith.addf %26, %27 : vector<16x1xf32>
      %29 = math.rsqrt %28 : vector<16x1xf32>
      %30 = vector.broadcast %29 : vector<16x1xf32> to vector<16x32xf32>
      %31 = arith.mulf %21, %30 : vector<16x32xf32>
      %c0_19 = arith.constant 0 : index
      %c0_20 = arith.constant 0 : index
      %32 = vector.load %arg5[%c0_19, %c0_20] : memref<1x32xf32, #tpu.memory_space<vmem>>, vector<1x32xf32>
      %33 = vector.broadcast %32 : vector<1x32xf32> to vector<16x32xf32>
      %34 = arith.mulf %31, %33 : vector<16x32xf32>
      %35 = arith.truncf %34 : vector<16x32xf32> to vector<16x32xbf16>
      %c0_21 = arith.constant 0 : index
      %c0_22 = arith.constant 0 : index
      %36 = vector.load %arg6[%c0_21, %c0_22] : memref<16x32xbf16, #tpu.memory_space<vmem>>, vector<16x32xbf16>
      tpu.vector_store %arg6[%c0_21, %c0_22], %35 {strides = array<i32>} : memref<16x32xbf16, #tpu.memory_space<vmem>>, vector<16x32xbf16>,
      %37 = arith.truncf %15 : vector<16x32xf32> to vector<16x32xbf16>
      %c0_23 = arith.constant 0 : index
      %c0_24 = arith.constant 0 : index
      %38 = vector.load %arg7[%c0_23, %c0_24] : memref<16x32xbf16, #tpu.memory_space<vmem>>, vector<16x32xbf16>
      tpu.vector_store %arg7[%c0_23, %c0_24], %37 {strides = array<i32>} : memref<16x32xbf16, #tpu.memory_space<vmem>>, vector<16x32xbf16>,
    } else {
    }
    return
  }
  func.func @transform_0(%arg0: i32, %arg1: i32) -> (i32, i32) {
    %c0_i32 = arith.constant 0 : i32
    return %arg0, %arg1 : i32, i32
  }
  func.func @transform_1(%arg0: i32, %arg1: i32) -> (i32, i32) {
    %c0_i32 = arith.constant 0 : i32
    %c0_i32_0 = arith.constant 0 : i32
    return %arg1, %c0_i32 : i32, i32
  }
  func.func @transform_2(%arg0: i32, %arg1: i32) -> (i32, i32) {
    %c0_i32 = arith.constant 0 : i32
    %c0_i32_0 = arith.constant 0 : i32
    return %arg0, %c0_i32 : i32, i32
  }
  func.func @transform_3(%arg0: i32, %arg1: i32) -> (i32, i32) {
    %c0_i32 = arith.constant 0 : i32
    %c0_i32_0 = arith.constant 0 : i32
    %c0_i32_1 = arith.constant 0 : i32
    return %c0_i32, %c0_i32_0 : i32, i32
  }
  func.func @transform_4(%arg0: i32, %arg1: i32) -> (i32, i32) {
    %c0_i32 = arith.constant 0 : i32
    %c0_i32_0 = arith.constant 0 : i32
    return %arg0, %c0_i32 : i32, i32
  }
  func.func @transform_5(%arg0: i32, %arg1: i32) -> (i32, i32) {
    %c0_i32 = arith.constant 0 : i32
    %c0_i32_0 = arith.constant 0 : i32
    return %arg0, %c0_i32 : i32, i32
  }
}

module attributes {stable_mosaic.version = 11 : i64} {
  func.func @_moe_kernel(%arg0: i32, %arg1: i32, %arg2: i32, %arg3: memref<16x32xbf16, #tpu.memory_space<vmem>>, %arg4: memref<1x32x64xbf16, #tpu.memory_space<vmem>>, %arg5: memref<1x32x64xbf16, #tpu.memory_space<vmem>>, %arg6: memref<1x64x32xbf16, #tpu.memory_space<vmem>>, %arg7: memref<1x16x1xf32, #tpu.memory_space<vmem>>, %arg8: memref<16x32xbf16, #tpu.memory_space<vmem>>, %arg9: memref<16x32xbf16, #tpu.memory_space<vmem>>, %arg10: memref<16x32xf32, #tpu.memory_space<vmem>>) attributes {dimension_semantics = [#tpu.dimension_semantics<parallel>, #tpu.dimension_semantics<arbitrary>, #tpu.dimension_semantics<arbitrary>], iteration_bounds = array<i64: 1, 4, 1>, scalar_prefetch = 0 : i64, scratch_operands = 1 : i64, tpu.core_type = #tpu.core_type<tc>, window_params = [{transform_indices = @transform_0, window_bounds = array<i64: 16, 32>}, {transform_indices = @transform_1, window_bounds = array<i64: 1, 32, 64>}, {transform_indices = @transform_2, window_bounds = array<i64: 1, 32, 64>}, {transform_indices = @transform_3, window_bounds = array<i64: 1, 64, 32>}, {transform_indices = @transform_4, window_bounds = array<i64: 1, 16, 1>}, {transform_indices = @transform_5, window_bounds = array<i64: 16, 32>}, {transform_indices = @transform_6, window_bounds = array<i64: 16, 32>}]} {
    %c0_i32 = arith.constant 0 : i32
    %0 = arith.cmpi eq, %arg1, %c0_i32 : i32
    %c0_i32_0 = arith.constant 0 : i32
    %1 = arith.cmpi eq, %arg2, %c0_i32_0 : i32
    %2 = arith.andi %0, %1 : i1
    %3 = arith.extui %2 : i1 to i32
    %c0_i32_1 = arith.constant 0 : i32
    %4 = arith.cmpi ne, %3, %c0_i32_1 : i32
    scf.if %4 {
      %cst_24 = arith.constant 0.000000e+00 : f32
      %35 = vector.broadcast %cst_24 : f32 to vector<16x32xf32>
      %c0_25 = arith.constant 0 : index
      %c0_26 = arith.constant 0 : index
      %36 = vector.load %arg10[%c0_25, %c0_26] : memref<16x32xf32, #tpu.memory_space<vmem>>, vector<16x32xf32>
      tpu.vector_store %arg10[%c0_25, %c0_26], %35 {strides = array<i32>} : memref<16x32xf32, #tpu.memory_space<vmem>>, vector<16x32xf32>,
    } else {
    }
    %c0 = arith.constant 0 : index
    %c0_2 = arith.constant 0 : index
    %5 = vector.load %arg3[%c0, %c0_2] : memref<16x32xbf16, #tpu.memory_space<vmem>>, vector<16x32xbf16>
    %c0_3 = arith.constant 0 : index
    %c0_4 = arith.constant 0 : index
    %c0_5 = arith.constant 0 : index
    %6 = vector.load %arg4[%c0_3, %c0_4, %c0_5] : memref<1x32x64xbf16, #tpu.memory_space<vmem>>, vector<1x32x64xbf16>
    %7 = vector.shape_cast %6 : vector<1x32x64xbf16> to vector<32x64xbf16>
    %cst = arith.constant dense<0.000000e+00> : vector<16x64xf32>
    %8 = tpu.matmul %5, %7, %cst {dimension_numbers = #tpu.dot_dimension_numbers<[1], [0], [0], [1], [0, 0, 1, 1], [], []>} : vector<16x32xbf16>, vector<32x64xbf16>, vector<16x64xf32> -> vector<16x64xf32>
    %c0_6 = arith.constant 0 : index
    %c0_7 = arith.constant 0 : index
    %c0_8 = arith.constant 0 : index
    %9 = vector.load %arg5[%c0_6, %c0_7, %c0_8] : memref<1x32x64xbf16, #tpu.memory_space<vmem>>, vector<1x32x64xbf16>
    %10 = vector.shape_cast %9 : vector<1x32x64xbf16> to vector<32x64xbf16>
    %cst_9 = arith.constant dense<0.000000e+00> : vector<16x64xf32>
    %11 = tpu.matmul %5, %10, %cst_9 {dimension_numbers = #tpu.dot_dimension_numbers<[1], [0], [0], [1], [0, 0, 1, 1], [], []>} : vector<16x32xbf16>, vector<32x64xbf16>, vector<16x64xf32> -> vector<16x64xf32>
    %12 = arith.negf %8 : vector<16x64xf32>
    %13 = math.exp %12 : vector<16x64xf32>
    %cst_10 = arith.constant 1.000000e+00 : f32
    %14 = vector.broadcast %cst_10 : f32 to vector<16x64xf32>
    %15 = arith.addf %14, %13 : vector<16x64xf32>
    %16 = arith.divf %14, %15 : vector<16x64xf32>
    %17 = arith.mulf %8, %16 : vector<16x64xf32>
    %18 = arith.mulf %17, %11 : vector<16x64xf32>
    %19 = arith.truncf %18 : vector<16x64xf32> to vector<16x64xbf16>
    %c0_11 = arith.constant 0 : index
    %c0_12 = arith.constant 0 : index
    %c0_13 = arith.constant 0 : index
    %20 = vector.load %arg6[%c0_11, %c0_12, %c0_13] : memref<1x64x32xbf16, #tpu.memory_space<vmem>>, vector<1x64x32xbf16>
    %21 = vector.shape_cast %20 : vector<1x64x32xbf16> to vector<64x32xbf16>
    %cst_14 = arith.constant dense<0.000000e+00> : vector<16x32xf32>
    %22 = tpu.matmul %19, %21, %cst_14 {dimension_numbers = #tpu.dot_dimension_numbers<[1], [0], [0], [1], [0, 0, 1, 1], [], []>} : vector<16x64xbf16>, vector<64x32xbf16>, vector<16x32xf32> -> vector<16x32xf32>
    %c0_15 = arith.constant 0 : index
    %c0_16 = arith.constant 0 : index
    %23 = vector.load %arg10[%c0_15, %c0_16] : memref<16x32xf32, #tpu.memory_space<vmem>>, vector<16x32xf32>
    %c0_17 = arith.constant 0 : index
    %c0_18 = arith.constant 0 : index
    %c0_19 = arith.constant 0 : index
    %24 = vector.load %arg7[%c0_17, %c0_18, %c0_19] : memref<1x16x1xf32, #tpu.memory_space<vmem>>, vector<1x16x1xf32>
    %25 = vector.shape_cast %24 : vector<1x16x1xf32> to vector<16x1xf32>
    %26 = vector.broadcast %25 : vector<16x1xf32> to vector<16x32xf32>
    %27 = arith.mulf %26, %22 : vector<16x32xf32>
    %28 = arith.addf %23, %27 : vector<16x32xf32>
    %c0_20 = arith.constant 0 : index
    %c0_21 = arith.constant 0 : index
    %29 = vector.load %arg10[%c0_20, %c0_21] : memref<16x32xf32, #tpu.memory_space<vmem>>, vector<16x32xf32>
    tpu.vector_store %arg10[%c0_20, %c0_21], %28 {strides = array<i32>} : memref<16x32xf32, #tpu.memory_space<vmem>>, vector<16x32xf32>,
    %c3_i32 = arith.constant 3 : i32
    %30 = arith.cmpi eq, %arg1, %c3_i32 : i32
    %c0_i32_22 = arith.constant 0 : i32
    %31 = arith.cmpi eq, %arg2, %c0_i32_22 : i32
    %32 = arith.andi %30, %31 : i1
    %33 = arith.extui %32 : i1 to i32
    %c0_i32_23 = arith.constant 0 : i32
    %34 = arith.cmpi ne, %33, %c0_i32_23 : i32
    scf.if %34 {
      %c0_24 = arith.constant 0 : index
      %c0_25 = arith.constant 0 : index
      %35 = vector.load %arg10[%c0_24, %c0_25] : memref<16x32xf32, #tpu.memory_space<vmem>>, vector<16x32xf32>
      %c0_26 = arith.constant 0 : index
      %c0_27 = arith.constant 0 : index
      %36 = vector.load %arg8[%c0_26, %c0_27] : memref<16x32xbf16, #tpu.memory_space<vmem>>, vector<16x32xbf16>
      %37 = arith.extf %36 : vector<16x32xbf16> to vector<16x32xf32>
      %38 = arith.addf %35, %37 : vector<16x32xf32>
      %39 = arith.truncf %38 : vector<16x32xf32> to vector<16x32xbf16>
      %c0_28 = arith.constant 0 : index
      %c0_29 = arith.constant 0 : index
      %40 = vector.load %arg9[%c0_28, %c0_29] : memref<16x32xbf16, #tpu.memory_space<vmem>>, vector<16x32xbf16>
      tpu.vector_store %arg9[%c0_28, %c0_29], %39 {strides = array<i32>} : memref<16x32xbf16, #tpu.memory_space<vmem>>, vector<16x32xbf16>,
    } else {
    }
    return
  }
  func.func @transform_0(%arg0: i32, %arg1: i32, %arg2: i32) -> (i32, i32) {
    %c0_i32 = arith.constant 0 : i32
    %c0_i32_0 = arith.constant 0 : i32
    return %arg0, %c0_i32 : i32, i32
  }
  func.func @transform_1(%arg0: i32, %arg1: i32, %arg2: i32) -> (i32, i32, i32) {
    %c0_i32 = arith.constant 0 : i32
    %c0_i32_0 = arith.constant 0 : i32
    return %arg1, %c0_i32, %arg2 : i32, i32, i32
  }
  func.func @transform_2(%arg0: i32, %arg1: i32, %arg2: i32) -> (i32, i32, i32) {
    %c0_i32 = arith.constant 0 : i32
    %c0_i32_0 = arith.constant 0 : i32
    return %arg1, %c0_i32, %arg2 : i32, i32, i32
  }
  func.func @transform_3(%arg0: i32, %arg1: i32, %arg2: i32) -> (i32, i32, i32) {
    %c0_i32 = arith.constant 0 : i32
    %c0_i32_0 = arith.constant 0 : i32
    return %arg1, %arg2, %c0_i32 : i32, i32, i32
  }
  func.func @transform_4(%arg0: i32, %arg1: i32, %arg2: i32) -> (i32, i32, i32) {
    %c0_i32 = arith.constant 0 : i32
    %c0_i32_0 = arith.constant 0 : i32
    return %arg1, %arg0, %c0_i32 : i32, i32, i32
  }
  func.func @transform_5(%arg0: i32, %arg1: i32, %arg2: i32) -> (i32, i32) {
    %c0_i32 = arith.constant 0 : i32
    %c0_i32_0 = arith.constant 0 : i32
    return %arg0, %c0_i32 : i32, i32
  }
  func.func @transform_6(%arg0: i32, %arg1: i32, %arg2: i32) -> (i32, i32) {
    %c0_i32 = arith.constant 0 : i32
    %c0_i32_0 = arith.constant 0 : i32
    return %arg0, %c0_i32 : i32, i32
  }
}

module attributes {stable_mosaic.version = 11 : i64} {
  func.func @_ln_kernel(%arg0: i32, %arg1: memref<16x32xbf16, #tpu.memory_space<vmem>>, %arg2: memref<1x32xf32, #tpu.memory_space<vmem>>, %arg3: memref<16x32xbf16, #tpu.memory_space<vmem>>) attributes {dimension_semantics = [#tpu.dimension_semantics<parallel>], iteration_bounds = array<i64: 1>, scalar_prefetch = 0 : i64, scratch_operands = 0 : i64, tpu.core_type = #tpu.core_type<tc>, window_params = [{transform_indices = @transform_0, window_bounds = array<i64: 16, 32>}, {pipeline_mode = #tpu.pipeline_mode<synchronous>, transform_indices = @transform_1, window_bounds = array<i64: 1, 32>}, {transform_indices = @transform_2, window_bounds = array<i64: 16, 32>}]} {
    %c0 = arith.constant 0 : index
    %c0_0 = arith.constant 0 : index
    %0 = vector.load %arg1[%c0, %c0_0] : memref<16x32xbf16, #tpu.memory_space<vmem>>, vector<16x32xbf16>
    %1 = arith.extf %0 : vector<16x32xbf16> to vector<16x32xf32>
    %cst = arith.constant dense<0.000000e+00> : vector<16xf32>
    %2 = vector.multi_reduction <add>, %1, %cst [1] : vector<16x32xf32> to vector<16xf32>
    %3 = vector.shape_cast %2 : vector<16xf32> to vector<16x1xf32>
    %cst_1 = arith.constant 3.200000e+01 : f32
    %4 = vector.broadcast %cst_1 : f32 to vector<16x1xf32>
    %5 = arith.divf %3, %4 : vector<16x1xf32>
    %6 = vector.broadcast %5 : vector<16x1xf32> to vector<16x32xf32>
    %7 = arith.subf %1, %6 : vector<16x32xf32>
    %8 = arith.mulf %7, %7 : vector<16x32xf32>
    %cst_2 = arith.constant dense<0.000000e+00> : vector<16xf32>
    %9 = vector.multi_reduction <add>, %8, %cst_2 [1] : vector<16x32xf32> to vector<16xf32>
    %10 = vector.shape_cast %9 : vector<16xf32> to vector<16x1xf32>
    %cst_3 = arith.constant 3.200000e+01 : f32
    %11 = vector.broadcast %cst_3 : f32 to vector<16x1xf32>
    %12 = arith.divf %10, %11 : vector<16x1xf32>
    %cst_4 = arith.constant 9.99999974E-6 : f32
    %13 = vector.broadcast %cst_4 : f32 to vector<16x1xf32>
    %14 = arith.addf %12, %13 : vector<16x1xf32>
    %15 = math.rsqrt %14 : vector<16x1xf32>
    %16 = vector.broadcast %15 : vector<16x1xf32> to vector<16x32xf32>
    %17 = arith.mulf %7, %16 : vector<16x32xf32>
    %c0_5 = arith.constant 0 : index
    %c0_6 = arith.constant 0 : index
    %18 = vector.load %arg2[%c0_5, %c0_6] : memref<1x32xf32, #tpu.memory_space<vmem>>, vector<1x32xf32>
    %19 = vector.broadcast %18 : vector<1x32xf32> to vector<16x32xf32>
    %20 = arith.mulf %17, %19 : vector<16x32xf32>
    %21 = arith.truncf %20 : vector<16x32xf32> to vector<16x32xbf16>
    %c0_7 = arith.constant 0 : index
    %c0_8 = arith.constant 0 : index
    %22 = vector.load %arg3[%c0_7, %c0_8] : memref<16x32xbf16, #tpu.memory_space<vmem>>, vector<16x32xbf16>
    tpu.vector_store %arg3[%c0_7, %c0_8], %21 {strides = array<i32>} : memref<16x32xbf16, #tpu.memory_space<vmem>>, vector<16x32xbf16>,
    return
  }
  func.func @transform_0(%arg0: i32) -> (i32, i32) {
    %c0_i32 = arith.constant 0 : i32
    %c0_i32_0 = arith.constant 0 : i32
    return %arg0, %c0_i32 : i32, i32
  }
  func.func @transform_1(%arg0: i32) -> (i32, i32) {
    %c0_i32 = arith.constant 0 : i32
    %c0_i32_0 = arith.constant 0 : i32
    %c0_i32_1 = arith.constant 0 : i32
    return %c0_i32, %c0_i32_0 : i32, i32
  }
  func.func @transform_2(%arg0: i32) -> (i32, i32) {
    %c0_i32 = arith.constant 0 : i32
    %c0_i32_0 = arith.constant 0 : i32
    return %arg0, %c0_i32 : i32, i32
  }
}

</mosaic_0001>

<llo_original>
// kernel: dbrx_model.12
$region0: #{dbrx_model.12}
  #allocation0 [shape = 'u32[]', space=smem, size = 0x4, offset = 0x4, fixed_abs, tag = 'smem constant byte address 0x4 - core index']
  #allocation1 [shape = 'u32[72,128]{1,0:T(1,128)}', space=vmem, size = 0x9000, scoped, tag = 'internal scratch']
  #allocation2 [shape = 'f32[16,64]{1,0:T(8,128)}', space=vmem, size = 0x2000, scoped, tag = 'scratch operand']
  %s0 = inlined_call_operand.vmem [shape: bf16[16,32], index: 0, kind: input, shape index: {}]
  %s1 = inlined_call_operand.vmem [shape: bf16[32,64], index: 1, kind: input, shape index: {}]
  %s2 = inlined_call_operand.vmem [shape: bf16[16,64], index: 2, kind: output, shape index: {}]
  %s3 = sld [smem:[#allocation0]]
  $region26: #{dbrx_model.12} parent=0
    _
  %s5 = ssub.s32 1, %s3
  %s6 = scalar_select 0, %s5, %s3
  // Predicated region
  $region2: #{dbrx_model.12} parent=0 // pred_check
    _
  $region3: #{dbrx_model.12} parent=0 // pred_check_branch
    %8 = sbr.rel (0) target = $region5
  $region4: #{dbrx_model.12} parent=0 // pred_region
    _
  $region5: #{dbrx_model.12} parent=0 // pred_fallthru
    _
  // Predicated region
  $region6: #{dbrx_model.12} parent=0 // pred_check
    _
  $region7: #{dbrx_model.12} parent=0 // pred_check_branch
    %10 = sbr.rel (0) target = $region9
  $region8: #{dbrx_model.12} parent=0 // pred_region
    _
  $region9: #{dbrx_model.12} parent=0 // pred_fallthru
    _
  %p12 = scmp.eq.s32.totalorder 0, 0
  // Predicated region
  $region10: #{dbrx_model.12} parent=0 // pred_check
    %p13 = pneg %p12
  $region11: #{dbrx_model.12} parent=0 // pred_check_branch
    %15 = sbr.rel (%p13) target = $region13
  $region12: #{dbrx_model.12} parent=0 // pred_region
    %vm16 = vcmask 523264
    %17 = vst.msk [vmem:[#allocation2] sm:$0xff] %vm16, 0.0
    %18 = vst.msk [vmem:[#allocation2 + $0x8] sm:$0xff] %vm16, 0.0
  $region13: #{dbrx_model.12} parent=0 // pred_fallthru
    _
  %v19 = vld [vmem:[#allocation2] sm:$0xff]
  %v20 = vld [vmem:[#allocation2 + $0x8] sm:$0xff]
  %v21 = vld [vmem:[%s0] sm:$0xf]
  %v22 = vld [vmem:[%s0 + $0x4] sm:$0xf]
  %v23 = vld [vmem:[%s1] sm:$0xf]
  %v24 = vld [vmem:[%s1 + $0x4] sm:$0xf]
  %v25 = vld [vmem:[%s1 + $0x8] sm:$0xf]
  %v26 = vld [vmem:[%s1 + $0xc] sm:$0xf]
  %v29 = vunpack.c.l.b16 %v21
  %v30 = vunpack.c.l.b16 %v22
  %v31 = vpack.c.b16 %v30, %v29
  %v36 = vunpack.c.l.b16 %v23
  %v37 = vunpack.c.l.b16 %v24
  %v38 = vunpack.c.l.b16 %v25
  %v39 = vunpack.c.l.b16 %v26
  %v40 = vpack.c.b16 %v37, %v36
  %v41 = vpack.c.b16 %v39, %v38
  %vm44 = vcmask 261120
  %v46 = vsel %vm44, %v31, 0
  %48 = vmatpush.bf16.msra.mxu0 0
  %49 = vmatpush.bf16.msra.mxu0 0
  %50 = vmatpush.bf16.msra.mxu0 0
  %51 = vmatpush.bf16.msra.mxu0 0
  %52 = vmatpush.bf16.msra.mxu0 0
  %53 = vmatpush.bf16.msra.mxu0 0
  %54 = vmatpush.bf16.msra.mxu0 %v41
  %55 = vmatpush.bf16.msra.mxu0 %v40
  %56 = vmatmul.bf16.gmra.mxu0 %v46
  %v57 = vpop.f32.mrf.mxu0
  %v58 = vadd.f32 0.0, %v57
  %v59 = vpop.f32.mrf.mxu0
  %v60 = vadd.f32 0.0, %v59
  %61 = vdwg.mxu0
  %v62 = vadd.f32 %v19, %v58
  %v63 = vadd.f32 %v20, %v60
  %vm64 = vcmask 523264
  %65 = vst.msk [vmem:[#allocation2] sm:$0xff] %vm64, %v62
  %66 = vst.msk [vmem:[#allocation2 + $0x8] sm:$0xff] %vm64, %v63
  // Predicated region
  $region14: #{dbrx_model.12} parent=0 // pred_check
    %p67 = pneg %p12
  $region15: #{dbrx_model.12} parent=0 // pred_check_branch
    %69 = sbr.rel (%p67) target = $region17
  $region16: #{dbrx_model.12} parent=0 // pred_region
    %v70 = vld [vmem:[#allocation2] sm:$0xff]
    %v71 = vld [vmem:[#allocation2 + $0x8] sm:$0xff]
    %v72 = vmax.f32 %v70, -8.0
    %v73 = vmax.f32 %v71, -8.0
    %v74 = vmin.f32 %v72, 8.0
    %v75 = vmin.f32 %v73, 8.0
    %v76 = vpack.c.bf16 %v74, %v74
    %v77 = vpack.c.bf16 %v75, %v75
    %vm78 = vcmask 519168
    %79 = vst.msk [vmem:[%s2] sm:$0xf] %vm78, %v76
    %80 = vst.msk [vmem:[%s2 + $0x4] sm:$0xf] %vm78, %v77
  $region17: #{dbrx_model.12} parent=0 // pred_fallthru
    _
  // Predicated region
  $region18: #{dbrx_model.12} parent=0 // pred_check
    _
  $region19: #{dbrx_model.12} parent=0 // pred_check_branch
    %82 = sbr.rel (0) target = $region21
  $region20: #{dbrx_model.12} parent=0 // pred_region
    _
  $region21: #{dbrx_model.12} parent=0 // pred_fallthru
    _
  // Predicated region
  $region22: #{dbrx_model.12} parent=0 // pred_check
    _
  $region23: #{dbrx_model.12} parent=0 // pred_check_branch
    %84 = sbr.rel (0) target = $region25
  $region24: #{dbrx_model.12} parent=0 // pred_region
    _
  $region25: #{dbrx_model.12} parent=0 // pred_fallthru
    _

// kernel: dbrx_model.11
$region0: #{dbrx_model.11}
  #allocation0 [shape = 'u32[]', space=smem, size = 0x4, offset = 0x4, fixed_abs, tag = 'smem constant byte address 0x4 - core index']
  #allocation1 [shape = 'u32[72,128]{1,0:T(1,128)}', space=vmem, size = 0x9000, scoped, tag = 'internal scratch']
  %s0 = inlined_call_operand.vmem [shape: bf16[16,32], index: 0, kind: input, shape index: {}]
  %s1 = inlined_call_operand.vmem [shape: f32[1,32], index: 1, kind: input, shape index: {}]
  %s2 = inlined_call_operand.vmem [shape: bf16[16,32], index: 2, kind: output, shape index: {}]
  %s3 = sld [smem:[#allocation0]]
  $region18: #{dbrx_model.11} parent=0
    _
  %s5 = ssub.s32 1, %s3
  %s6 = scalar_select 0, %s5, %s3
  // Predicated region
  $region2: #{dbrx_model.11} parent=0 // pred_check
    _
  $region3: #{dbrx_model.11} parent=0 // pred_check_branch
    %8 = sbr.rel (0) target = $region5
  $region4: #{dbrx_model.11} parent=0 // pred_region
    _
  $region5: #{dbrx_model.11} parent=0 // pred_fallthru
    _
  // Predicated region
  $region6: #{dbrx_model.11} parent=0 // pred_check
    _
  $region7: #{dbrx_model.11} parent=0 // pred_check_branch
    %10 = sbr.rel (0) target = $region9
  $region8: #{dbrx_model.11} parent=0 // pred_region
    _
  $region9: #{dbrx_model.11} parent=0 // pred_fallthru
    _
  %v11 = vld [vmem:[%s0] sm:$0xf]
  %v12 = vld [vmem:[%s0 + $0x4] sm:$0xf]
  %v13 = vunpack.c.l.bf16 %v11
  %v14 = vunpack.c.l.bf16 %v12
  %vm15 = vcmask 261120
  %v16 = vsel %vm15, %v13, 0.0
  %17 = vadd.xlane.f32.xlu0 %v16
  %v18 = vpop.xlane.xlu0 %17
  %v19 = vsel %vm15, %v14, 0.0
  %20 = vadd.xlane.f32.xlu0 %v19
  %v21 = vpop.xlane.xlu0 %20
  %v22 = vrcp.pop 32.0
  %v23 = vmul.f32 32.0, %v22
  %v24 = vsub.f32 1.0, %v23
  %v25 = vmul.f32 %v22, %v24
  %v26 = vadd.f32 %v22, %v25
  %vm27 = vweird.f32 %v22
  %v28 = vsel %vm27, %v22, %v26
  %v29 = vmul.f32 %v18, %v28
  %v30 = vmul.f32 %v21, %v28
  %v31 = vsub.f32 %v13, %v29
  %v32 = vsub.f32 %v14, %v30
  %v33 = vmul.f32 %v31, %v31
  %v34 = vmul.f32 %v32, %v32
  %v35 = vsel %vm15, %v33, 0.0
  %36 = vadd.xlane.f32.xlu0 %v35
  %v37 = vpop.xlane.xlu0 %36
  %v38 = vsel %vm15, %v34, 0.0
  %39 = vadd.xlane.f32.xlu0 %v38
  %v40 = vpop.xlane.xlu0 %39
  %v41 = vmul.f32 %v37, %v28
  %v42 = vmul.f32 %v40, %v28
  %v43 = vadd.f32 %v41, 1e-05
  %v44 = vadd.f32 %v42, 1e-05
  %v45 = vrsqrt.pop %v43
  %v46 = vmul.f32 %v45, %v43
  %v47 = vmul.f32 %v46, %v45
  %v48 = vmul.f32 0.5, %v47
  %v49 = vsub.f32 1.5, %v48
  %v50 = vmul.f32 %v45, %v49
  %vm51 = vweird.f32 %v43
  %vm52 = vweird.f32 %v45
  %vm53 = vmor %vm51, %vm52
  %v54 = vsel %vm53, %v45, %v50
  %v55 = vrsqrt.pop %v44
  %v56 = vmul.f32 %v55, %v44
  %v57 = vmul.f32 %v56, %v55
  %v58 = vmul.f32 0.5, %v57
  %v59 = vsub.f32 1.5, %v58
  %v60 = vmul.f32 %v55, %v59
  %vm61 = vweird.f32 %v44
  %vm62 = vweird.f32 %v55
  %vm63 = vmor %vm61, %vm62
  %v64 = vsel %vm63, %v55, %v60
  %v65 = vmul.f32 %v31, %v54
  %v66 = vmul.f32 %v32, %v64
  %v67 = vld [vmem:[%s1] sm:$0x1]
  %v69 = vperm.slane %v67, 0
  %v71 = vmul.f32 %v65, %v69
  %v72 = vmul.f32 %v66, %v69
  %v73 = vpack.c.bf16 %v71, %v71
  %v74 = vpack.c.bf16 %v72, %v72
  %vm75 = vcmask 257024
  %76 = vst.msk [vmem:[%s2] sm:$0xf] %vm75, %v73
  %77 = vst.msk [vmem:[%s2 + $0x4] sm:$0xf] %vm75, %v74
  // Predicated region
  $region10: #{dbrx_model.11} parent=0 // pred_check
    _
  $region11: #{dbrx_model.11} parent=0 // pred_check_branch
    %79 = sbr.rel (0) target = $region13
  $region12: #{dbrx_model.11} parent=0 // pred_region
    _
  $region13: #{dbrx_model.11} parent=0 // pred_fallthru
    _
  // Predicated region
  $region14: #{dbrx_model.11} parent=0 // pred_check
    _
  $region15: #{dbrx_model.11} parent=0 // pred_check_branch
    %81 = sbr.rel (0) target = $region17
  $region16: #{dbrx_model.11} parent=0 // pred_region
    _
  $region17: #{dbrx_model.11} parent=0 // pred_fallthru
    _

// kernel: dbrx_model.14
$region0: #{dbrx_model.14}
  #allocation0 [shape = 'u32[]', space=smem, size = 0x4, offset = 0x4, fixed_abs, tag = 'smem constant byte address 0x4 - core index']
  #allocation1 [shape = 'u32[72,128]{1,0:T(1,128)}', space=vmem, size = 0x9000, scoped, tag = 'internal scratch']
  #allocation2 [shape = 'f32[16,32]{1,0:T(8,128)}', space=vmem, size = 0x2000, scoped, tag = 'scratch operand']
  %s0 = inlined_call_operand.vmem [shape: bf16[16,32], index: 0, kind: input, shape index: {}]
  %s1 = inlined_call_operand.vmem [shape: bf16[32,32], index: 1, kind: input, shape index: {}]
  %s2 = inlined_call_operand.vmem [shape: bf16[16,32], index: 2, kind: input, shape index: {}]
  %s3 = inlined_call_operand.vmem [shape: f32[1,32], index: 3, kind: input, shape index: {}]
  %s4 = inlined_call_operand.vmem [shape: bf16[16,32], index: 4, kind: output, shape index: {0}]
  %s5 = inlined_call_operand.vmem [shape: bf16[16,32], index: 5, kind: output, shape index: {1}]
  %6 = xla_tuple %s4, %s5
  %s7 = sld [smem:[#allocation0]]
  $region42: #{dbrx_model.14} parent=0
    _
  %s9 = ssub.s32 1, %s7
  %s10 = scalar_select 0, %s9, %s7
  // Predicated region
  $region2: #{dbrx_model.14} parent=0 // pred_check
    _
  $region3: #{dbrx_model.14} parent=0 // pred_check_branch
    %12 = sbr.rel (0) target = $region5
  $region4: #{dbrx_model.14} parent=0 // pred_region
    _
  $region5: #{dbrx_model.14} parent=0 // pred_fallthru
    _
  // Predicated region
  $region6: #{dbrx_model.14} parent=0 // pred_check
    _
  $region7: #{dbrx_model.14} parent=0 // pred_check_branch
    %14 = sbr.rel (0) target = $region9
  $region8: #{dbrx_model.14} parent=0 // pred_region
    _
  $region9: #{dbrx_model.14} parent=0 // pred_fallthru
    _
  // Predicated region
  $region10: #{dbrx_model.14} parent=0 // pred_check
    _
  $region11: #{dbrx_model.14} parent=0 // pred_check_branch
    %16 = sbr.rel (0) target = $region13
  $region12: #{dbrx_model.14} parent=0 // pred_region
    _
  $region13: #{dbrx_model.14} parent=0 // pred_fallthru
    _
  // Predicated region
  $region14: #{dbrx_model.14} parent=0 // pred_check
    _
  $region15: #{dbrx_model.14} parent=0 // pred_check_branch
    %18 = sbr.rel (0) target = $region17
  $region16: #{dbrx_model.14} parent=0 // pred_region
    _
  $region17: #{dbrx_model.14} parent=0 // pred_fallthru
    _
  %p20 = scmp.eq.s32.totalorder 0, 0
  // Predicated region
  $region18: #{dbrx_model.14} parent=0 // pred_check
    %p21 = pneg %p20
  $region19: #{dbrx_model.14} parent=0 // pred_check_branch
    %23 = sbr.rel (%p21) target = $region21
  $region20: #{dbrx_model.14} parent=0 // pred_region
    %vm24 = vcmask 261120
    %25 = vst.msk [vmem:[#allocation2] sm:$0xff] %vm24, 0.0
    %26 = vst.msk [vmem:[#allocation2 + $0x8] sm:$0xff] %vm24, 0.0
  $region21: #{dbrx_model.14} parent=0 // pred_fallthru
    _
  %v27 = vld [vmem:[#allocation2] sm:$0xff]
  %v28 = vld [vmem:[#allocation2 + $0x8] sm:$0xff]
  %v29 = vld [vmem:[%s0] sm:$0xf]
  %v30 = vld [vmem:[%s0 + $0x4] sm:$0xf]
  %v31 = vld [vmem:[%s1] sm:$0xf]
  %v32 = vld [vmem:[%s1 + $0x4] sm:$0xf]
  %v33 = vld [vmem:[%s1 + $0x8] sm:$0xf]
  %v34 = vld [vmem:[%s1 + $0xc] sm:$0xf]
  %v37 = vunpack.c.l.b16 %v29
  %v38 = vunpack.c.l.b16 %v30
  %v39 = vpack.c.b16 %v38, %v37
  %v44 = vunpack.c.l.b16 %v31
  %v45 = vunpack.c.l.b16 %v32
  %v46 = vunpack.c.l.b16 %v33
  %v47 = vunpack.c.l.b16 %v34
  %v48 = vpack.c.b16 %v45, %v44
  %v49 = vpack.c.b16 %v47, %v46
  %vm52 = vcmask 261120
  %v54 = vsel %vm52, %v39, 0
  %56 = vmatpush.bf16.msra.mxu0 0
  %57 = vmatpush.bf16.msra.mxu0 0
  %58 = vmatpush.bf16.msra.mxu0 0
  %59 = vmatpush.bf16.msra.mxu0 0
  %60 = vmatpush.bf16.msra.mxu0 0
  %61 = vmatpush.bf16.msra.mxu0 0
  %62 = vmatpush.bf16.msra.mxu0 %v49
  %63 = vmatpush.bf16.msra.mxu0 %v48
  %64 = vmatmul.bf16.gmra.mxu0 %v54
  %v65 = vpop.f32.mrf.mxu0
  %v66 = vadd.f32 0.0, %v65
  %v67 = vpop.f32.mrf.mxu0
  %v68 = vadd.f32 0.0, %v67
  %69 = vdwg.mxu0
  %v70 = vadd.f32 %v27, %v66
  %v71 = vadd.f32 %v28, %v68
  %72 = vst.msk [vmem:[#allocation2] sm:$0xff] %vm52, %v70
  %73 = vst.msk [vmem:[#allocation2 + $0x8] sm:$0xff] %vm52, %v71
  // Predicated region
  $region22: #{dbrx_model.14} parent=0 // pred_check
    %p74 = pneg %p20
  $region23: #{dbrx_model.14} parent=0 // pred_check_branch
    %76 = sbr.rel (%p74) target = $region25
  $region24: #{dbrx_model.14} parent=0 // pred_region
    %v77 = vld [vmem:[#allocation2] sm:$0xff]
    %v78 = vld [vmem:[#allocation2 + $0x8] sm:$0xff]
    %v79 = vld [vmem:[%s2] sm:$0xf]
    %v80 = vld [vmem:[%s2 + $0x4] sm:$0xf]
    %v81 = vunpack.c.l.bf16 %v79
    %v82 = vunpack.c.l.bf16 %v80
    %v83 = vadd.f32 %v77, %v81
    %v84 = vadd.f32 %v78, %v82
    %v85 = vsel %vm52, %v83, 0.0
    %86 = vadd.xlane.f32.xlu0 %v85
    %v87 = vpop.xlane.xlu0 %86
    %v88 = vsel %vm52, %v84, 0.0
    %89 = vadd.xlane.f32.xlu0 %v88
    %v90 = vpop.xlane.xlu0 %89
    %v91 = vrcp.pop 32.0
    %v92 = vmul.f32 32.0, %v91
    %v93 = vsub.f32 1.0, %v92
    %v94 = vmul.f32 %v91, %v93
    %v95 = vadd.f32 %v91, %v94
    %vm96 = vweird.f32 %v91
    %v97 = vsel %vm96, %v91, %v95
    %v98 = vmul.f32 %v87, %v97
    %v99 = vmul.f32 %v90, %v97
    %v100 = vsub.f32 %v83, %v98
    %v101 = vsub.f32 %v84, %v99
    %v102 = vmul.f32 %v100, %v100
    %v103 = vmul.f32 %v101, %v101
    %v104 = vsel %vm52, %v102, 0.0
    %105 = vadd.xlane.f32.xlu0 %v104
    %v106 = vpop.xlane.xlu0 %105
    %v107 = vsel %vm52, %v103, 0.0
    %108 = vadd.xlane.f32.xlu0 %v107
    %v109 = vpop.xlane.xlu0 %108
    %v110 = vmul.f32 %v106, %v97
    %v111 = vmul.f32 %v109, %v97
    %v112 = vadd.f32 %v110, 1e-05
    %v113 = vadd.f32 %v111, 1e-05
    %v114 = vrsqrt.pop %v112
    %v115 = vmul.f32 %v114, %v112
    %v116 = vmul.f32 %v115, %v114
    %v117 = vmul.f32 0.5, %v116
    %v118 = vsub.f32 1.5, %v117
    %v119 = vmul.f32 %v114, %v118
    %vm120 = vweird.f32 %v112
    %vm121 = vweird.f32 %v114
    %vm122 = vmor %vm120, %vm121
    %v123 = vsel %vm122, %v114, %v119
    %v124 = vrsqrt.pop %v113
    %v125 = vmul.f32 %v124, %v113
    %v126 = vmul.f32 %v125, %v124
    %v127 = vmul.f32 0.5, %v126
    %v128 = vsub.f32 1.5, %v127
    %v129 = vmul.f32 %v124, %v128
    %vm130 = vweird.f32 %v113
    %vm131 = vweird.f32 %v124
    %vm132 = vmor %vm130, %vm131
    %v133 = vsel %vm132, %v124, %v129
    %v134 = vmul.f32 %v100, %v123
    %v135 = vmul.f32 %v101, %v133
    %v136 = vld [vmem:[%s3] sm:$0x1]
    %v138 = vperm.slane %v136, 0
    %v140 = vmul.f32 %v134, %v138
    %v141 = vmul.f32 %v135, %v138
    %v142 = vpack.c.bf16 %v140, %v140
    %v143 = vpack.c.bf16 %v141, %v141
    %vm144 = vcmask 257024
    %145 = vst.msk [vmem:[%s4] sm:$0xf] %vm144, %v142
    %146 = vst.msk [vmem:[%s4 + $0x4] sm:$0xf] %vm144, %v143
    %v147 = vpack.c.bf16 %v83, %v83
    %v148 = vpack.c.bf16 %v84, %v84
    %149 = vst.msk [vmem:[%s5] sm:$0xf] %vm144, %v147
    %150 = vst.msk [vmem:[%s5 + $0x4] sm:$0xf] %vm144, %v148
  $region25: #{dbrx_model.14} parent=0 // pred_fallthru
    _
  // Predicated region
  $region26: #{dbrx_model.14} parent=0 // pred_check
    _
  $region27: #{dbrx_model.14} parent=0 // pred_check_branch
    %152 = sbr.rel (0) target = $region29
  $region28: #{dbrx_model.14} parent=0 // pred_region
    _
  $region29: #{dbrx_model.14} parent=0 // pred_fallthru
    _
  // Predicated region
  $region30: #{dbrx_model.14} parent=0 // pred_check
    _
  $region31: #{dbrx_model.14} parent=0 // pred_check_branch
    %154 = sbr.rel (0) target = $region33
  $region32: #{dbrx_model.14} parent=0 // pred_region
    _
  $region33: #{dbrx_model.14} parent=0 // pred_fallthru
    _
  // Predicated region
  $region34: #{dbrx_model.14} parent=0 // pred_check
    _
  $region35: #{dbrx_model.14} parent=0 // pred_check_branch
    %156 = sbr.rel (0) target = $region37
  $region36: #{dbrx_model.14} parent=0 // pred_region
    _
  $region37: #{dbrx_model.14} parent=0 // pred_fallthru
    _
  // Predicated region
  $region38: #{dbrx_model.14} parent=0 // pred_check
    _
  $region39: #{dbrx_model.14} parent=0 // pred_check_branch
    %158 = sbr.rel (0) target = $region41
  $region40: #{dbrx_model.14} parent=0 // pred_region
    _
  $region41: #{dbrx_model.14} parent=0 // pred_fallthru
    _

// kernel: dbrx_model.13
$region0: #{dbrx_model.13}
  #allocation0 [shape = 'u32[]', space=smem, size = 0x4, offset = 0x4, fixed_abs, tag = 'smem constant byte address 0x4 - core index']
  #allocation1 [shape = 'u32[72,128]{1,0:T(1,128)}', space=vmem, size = 0x9000, scoped, tag = 'internal scratch']
  #allocation2 [shape = 'f32[2,8,1]{2,1,0:T(8,128)}', space=vmem, size = 0x2000, scoped, tag = 'scratch operand']
  #allocation3 [shape = 'f32[2,8,1]{2,1,0:T(8,128)}', space=vmem, size = 0x2000, scoped, tag = 'scratch operand']
  #allocation4 [shape = 'f32[2,8,8]{2,1,0:T(8,128)}', space=vmem, size = 0x2000, scoped, tag = 'scratch operand']
  %s0 = inlined_call_operand.vmem [shape: bf16[2,4,8,8], index: 0, kind: input, shape index: {}]
  %s1 = inlined_call_operand.vmem [shape: bf16[2,2,8,8], index: 1, kind: input, shape index: {}]
  %s2 = inlined_call_operand.vmem [shape: bf16[2,2,8,8], index: 2, kind: input, shape index: {}]
  %s3 = inlined_call_operand.vmem [shape: bf16[2,4,8,8], index: 3, kind: output, shape index: {}]
  %s4 = sld [smem:[#allocation0]]
  $region65: #{dbrx_model.13} parent=0
    _
  %s6 = ssub.s32 1, %s4
  %s7 = scalar_select 0, %s6, %s4
  loop: start=0, step=1, limit=6
  $region2: #{dbrx_model.13} parent=0 // loop_pre_header
    _
  $region3: #{dbrx_model.13} parent=0 // loop_header
    %s9 = sphi 0, %s13
    %p10 = scmp.ge.s32.totalorder %s9, 6
    %s16 = sphi 0, %s42
    %s17 = sphi 0, %s38
    %s18 = sphi 0, %s34
    %s19 = sphi 0, %s30
    %s20 = sphi 0, %s16
    %s21 = sphi 0, %s17
    %s22 = sphi 0, %s18
    %s23 = sphi 0, %s19
    %s24 = sphi 0, %s20
    %s25 = sphi 0, %s21
    %s26 = sphi 0, %s22
    %s27 = sphi 0, %s23
    %s49 = sphi 0, %s51
    %s52 = sphi 0, %s49
    %s53 = sphi 0, %s52
    %s69 = sphi 0, %s53
    %s83 = sphi 0, %s85
    %s86 = sphi 0, %s83
    %s87 = sphi 0, %s86
    %s103 = sphi 0, %s87
    %s117 = sphi 0, %s119
    %s120 = sphi 0, %s117
    %s121 = sphi 0, %s120
    %s137 = sphi 0, %s121
    %s147 = sphi 0, %s149
    %s150 = sphi 0, %s147
    %s151 = sphi 0, %s150
    %s167 = sphi 0, %s151
  $region4: #{dbrx_model.13} parent=0 // loop_header_branch
    %12 = sbr.rel (%p10) target = $region8
  $region5: #{dbrx_model.13} parent=0 // loop_body
    %s14 = ssub.s32 %s9, 1
    %s15 = ssub.s32 %s9, 2
    %s28 = sadd.s32 1, %s19
    %p29 = scmp.ge.s32.totalorder %s28, 1
    %s30 = scalar_select %p29, 0, %s28
    %s31 = sadd.s32 1, %s18
    %s32 = scalar_select %p29, %s31, %s18
    %p33 = scmp.ge.s32.totalorder %s32, 1
    %s34 = scalar_select %p33, 0, %s32
    %s35 = sadd.s32 1, %s17
    %s36 = scalar_select %p33, %s35, %s17
    %p37 = scmp.ge.s32.totalorder %s36, 2
    %s38 = scalar_select %p37, 0, %s36
    %s39 = sadd.s32 1, %s16
    %s40 = scalar_select %p37, %s39, %s16
    %p41 = scmp.ge.s32.totalorder %s40, 2
    %s42 = scalar_select %p41, 0, %s40
    %s43 = ssub.s32 %s16, %s42
    %s44 = ssub.s32 %s17, %s38
    %s45 = sor.u32 %s43, %s44
    %s46 = ssub.s32 %s18, %s34
    %s47 = sor.u32 %s45, %s46
    %p48 = scmp.eq.s32.totalorder %s47, 0
    %s50 = sadd.s32 %s49, 1
    %s51 = scalar_select %p48, %s49, %s50
    %p54 = pneg %p48
    %p55 = scmp.eq.s32.totalorder %s9, 3
    %p56 = por %p54, %p55
    %p57 = scmp.ne.s32.totalorder %s49, %s52
    %p58 = scmp.eq.s32.totalorder %s9, 0
    %p59 = por %p57, %p58
    %p60 = scmp.ne.s32.totalorder %s49, %s52
    %p61 = scmp.eq.s32.totalorder %s14, 3
    %p62 = por %p60, %p61
    %p63 = scmp.ne.s32.totalorder %s52, %s53
    %p64 = scmp.eq.s32.totalorder %s14, 0
    %p65 = por %p63, %p64
    %p66 = scmp.ne.s32.totalorder %s52, %s53
    %p67 = scmp.eq.s32.totalorder %s15, 3
    %p68 = por %p66, %p67
    %p70 = scmp.ne.s32.totalorder %s53, %s69
    %p71 = scmp.eq.s32.totalorder %s15, 0
    %p72 = por %p70, %p71
    %p73 = scmp.lt.s32.totalorder %s19, %s18
    %s74 = scalar_select %p73, %s19, %s18
    %p75 = scmp.lt.s32.totalorder %s30, %s34
    %s76 = scalar_select %p75, %s30, %s34
    %s77 = ssub.s32 %s16, %s42
    %s78 = ssub.s32 %s17, %s38
    %s79 = sor.u32 %s77, %s78
    %s80 = ssub.s32 %s74, %s76
    %s81 = sor.u32 %s79, %s80
    %p82 = scmp.eq.s32.totalorder %s81, 0
    %s84 = sadd.s32 %s83, 1
    %s85 = scalar_select %p82, %s83, %s84
    %p88 = pneg %p82
    %p89 = scmp.eq.s32.totalorder %s9, 3
    %p90 = por %p88, %p89
    %p91 = scmp.ne.s32.totalorder %s83, %s86
    %p92 = scmp.eq.s32.totalorder %s9, 0
    %p93 = por %p91, %p92
    %p94 = scmp.ne.s32.totalorder %s83, %s86
    %p95 = scmp.eq.s32.totalorder %s14, 3
    %p96 = por %p94, %p95
    %p97 = scmp.ne.s32.totalorder %s86, %s87
    %p98 = scmp.eq.s32.totalorder %s14, 0
    %p99 = por %p97, %p98
    %p100 = scmp.ne.s32.totalorder %s86, %s87
    %p101 = scmp.eq.s32.totalorder %s15, 3
    %p102 = por %p100, %p101
    %p104 = scmp.ne.s32.totalorder %s87, %s103
    %p105 = scmp.eq.s32.totalorder %s15, 0
    %p106 = por %p104, %p105
    %p107 = scmp.lt.s32.totalorder %s19, %s18
    %s108 = scalar_select %p107, %s19, %s18
    %p109 = scmp.lt.s32.totalorder %s30, %s34
    %s110 = scalar_select %p109, %s30, %s34
    %s111 = ssub.s32 %s16, %s42
    %s112 = ssub.s32 %s17, %s38
    %s113 = sor.u32 %s111, %s112
    %s114 = ssub.s32 %s108, %s110
    %s115 = sor.u32 %s113, %s114
    %p116 = scmp.eq.s32.totalorder %s115, 0
    %s118 = sadd.s32 %s117, 1
    %s119 = scalar_select %p116, %s117, %s118
    %p122 = pneg %p116
    %p123 = scmp.eq.s32.totalorder %s9, 3
    %p124 = por %p122, %p123
    %p125 = scmp.ne.s32.totalorder %s117, %s120
    %p126 = scmp.eq.s32.totalorder %s9, 0
    %p127 = por %p125, %p126
    %p128 = scmp.ne.s32.totalorder %s117, %s120
    %p129 = scmp.eq.s32.totalorder %s14, 3
    %p130 = por %p128, %p129
    %p131 = scmp.ne.s32.totalorder %s120, %s121
    %p132 = scmp.eq.s32.totalorder %s14, 0
    %p133 = por %p131, %p132
    %p134 = scmp.ne.s32.totalorder %s120, %s121
    %p135 = scmp.eq.s32.totalorder %s15, 3
    %p136 = por %p134, %p135
    %p138 = scmp.ne.s32.totalorder %s121, %s137
    %p139 = scmp.eq.s32.totalorder %s15, 0
    %p140 = por %p138, %p139
    %s141 = ssub.s32 %s16, %s42
    %s142 = ssub.s32 %s17, %s38
    %s143 = sor.u32 %s141, %s142
    %s144 = ssub.s32 %s18, %s34
    %s145 = sor.u32 %s143, %s144
    %p146 = scmp.eq.s32.totalorder %s145, 0
    %s148 = sadd.s32 %s147, 1
    %s149 = scalar_select %p146, %s147, %s148
    %p152 = pneg %p146
    %p153 = scmp.eq.s32.totalorder %s9, 3
    %p154 = por %p152, %p153
    %p155 = scmp.ne.s32.totalorder %s147, %s150
    %p156 = scmp.eq.s32.totalorder %s9, 0
    %p157 = por %p155, %p156
    %p158 = scmp.ne.s32.totalorder %s147, %s150
    %p159 = scmp.eq.s32.totalorder %s14, 3
    %p160 = por %p158, %p159
    %p161 = scmp.ne.s32.totalorder %s150, %s151
    %p162 = scmp.eq.s32.totalorder %s14, 0
    %p163 = por %p161, %p162
    %p164 = scmp.ne.s32.totalorder %s150, %s151
    %p165 = scmp.eq.s32.totalorder %s15, 3
    %p166 = por %p164, %p165
    %p168 = scmp.ne.s32.totalorder %s151, %s167
    %p169 = scmp.eq.s32.totalorder %s15, 0
    %p170 = por %p168, %p169
    %p171 = scmp.le.s32.totalorder 1, %s9
    %p172 = scmp.lt.s32.totalorder %s9, 5
    %p173 = pnand %p171, %p172
    %p174 = pneg %p173
    // Predicated region
    $region9: #{dbrx_model.13} parent=5 // pred_check
      _
    $region10: #{dbrx_model.13} parent=5 // pred_check_branch
      %176 = sbr.rel (%p173) target = $region12
    $region11: #{dbrx_model.13} parent=5 // pred_region
      %s177 = ssub.s32 %s9, 1
    $region12: #{dbrx_model.13} parent=5 // pred_fallthru
      _
    %p178 = scmp.lt.s32.totalorder %s9, 4
    // Predicated region
    $region13: #{dbrx_model.13} parent=5 // pred_check
      %p179 = pneg %p178
    $region14: #{dbrx_model.13} parent=5 // pred_check_branch
      %181 = sbr.rel (%p179) target = $region16
    $region15: #{dbrx_model.13} parent=5 // pred_region
      // Predicated region
      $region17: #{dbrx_model.13} parent=15 // pred_check
        %p182 = pneg %p59
      $region18: #{dbrx_model.13} parent=15 // pred_check_branch
        %184 = sbr.rel (%p182) target = $region20
      $region19: #{dbrx_model.13} parent=15 // pred_region
        %s185 = smul.u32 2, %s17
        %p186 = scmp.lt.s32.totalorder %s16, 1
        %s187 = scalar_select %p186, %s16, 1
        %p188 = scmp.lt.s32.totalorder %s185, 3
        %s189 = scalar_select %p188, %s185, 3
        %p190 = scmp.lt.s32.totalorder %s18, 0
        %s191 = scalar_select %p190, %s18, 0
        %s192 = sadd.s32 %s191, %s189
        %s193 = smul.addr %s187, 4
        %s194 = sadd.s32 %s192, %s193
        %s195 = smul.addr %s194, 4
        %s196 = scalar_lea.vmem %s0, %s195
        %s197 = smul.u32 2, %s17
      $region20: #{dbrx_model.13} parent=15 // pred_fallthru
        _
      // Predicated region
      $region21: #{dbrx_model.13} parent=15 // pred_check
        %p198 = pneg %p93
      $region22: #{dbrx_model.13} parent=15 // pred_check_branch
        %200 = sbr.rel (%p198) target = $region24
      $region23: #{dbrx_model.13} parent=15 // pred_region
        %p201 = scmp.lt.s32.totalorder %s19, %s18
        %s202 = scalar_select %p201, %s19, %s18
        %p203 = scmp.lt.s32.totalorder %s16, 1
        %s204 = scalar_select %p203, %s16, 1
        %p205 = scmp.lt.s32.totalorder %s17, 1
        %s206 = scalar_select %p205, %s17, 1
        %p207 = scmp.lt.s32.totalorder %s202, 0
        %s208 = scalar_select %p207, %s202, 0
        %s209 = sadd.s32 %s208, %s206
        %s210 = smul.addr %s204, 2
        %s211 = sadd.s32 %s209, %s210
        %s212 = smul.addr %s211, 4
        %s213 = scalar_lea.vmem %s1, %s212
        %p214 = scmp.lt.s32.totalorder %s19, %s18
        %s215 = scalar_select %p214, %s19, %s18
      $region24: #{dbrx_model.13} parent=15 // pred_fallthru
        _
      // Predicated region
      $region25: #{dbrx_model.13} parent=15 // pred_check
        %p216 = pneg %p127
      $region26: #{dbrx_model.13} parent=15 // pred_check_branch
        %218 = sbr.rel (%p216) target = $region28
      $region27: #{dbrx_model.13} parent=15 // pred_region
        %p219 = scmp.lt.s32.totalorder %s19, %s18
        %s220 = scalar_select %p219, %s19, %s18
        %p221 = scmp.lt.s32.totalorder %s16, 1
        %s222 = scalar_select %p221, %s16, 1
        %p223 = scmp.lt.s32.totalorder %s17, 1
        %s224 = scalar_select %p223, %s17, 1
        %p225 = scmp.lt.s32.totalorder %s220, 0
        %s226 = scalar_select %p225, %s220, 0
        %s227 = sadd.s32 %s226, %s224
        %s228 = smul.addr %s222, 2
        %s229 = sadd.s32 %s227, %s228
        %s230 = smul.addr %s229, 4
        %s231 = scalar_lea.vmem %s2, %s230
        %p232 = scmp.lt.s32.totalorder %s19, %s18
        %s233 = scalar_select %p232, %s19, %s18
      $region28: #{dbrx_model.13} parent=15 // pred_fallthru
        _
    $region16: #{dbrx_model.13} parent=5 // pred_fallthru
      _
    %p234 = scmp.le.s32.totalorder 1, %s9
    %p235 = scmp.lt.s32.totalorder %s9, 5
    %p236 = pnand %p234, %p235
    %p237 = pneg %p236
    // Predicated region
    $region29: #{dbrx_model.13} parent=5 // pred_check
      _
    $region30: #{dbrx_model.13} parent=5 // pred_check_branch
      %239 = sbr.rel (%p236) target = $region32
    $region31: #{dbrx_model.13} parent=5 // pred_region
      %s240 = ssub.s32 %s9, 1
      %s241 = smul.u32 2, %s21
      %p242 = scmp.lt.s32.totalorder %s20, 1
      %s243 = scalar_select %p242, %s20, 1
      %p244 = scmp.lt.s32.totalorder %s241, 3
      %s245 = scalar_select %p244, %s241, 3
      %p246 = scmp.lt.s32.totalorder %s22, 0
      %s247 = scalar_select %p246, %s22, 0
      %s248 = sadd.s32 %s247, %s245
      %s249 = smul.addr %s243, 4
      %s250 = sadd.s32 %s248, %s249
      %s251 = smul.addr %s250, 4
      %s252 = scalar_lea.vmem %s0, %s251
      %p253 = pneg %p65
      %p254 = pneg %p62
      %p255 = scmp.lt.s32.totalorder %s23, %s22
      %s256 = scalar_select %p255, %s23, %s22
      %p257 = scmp.lt.s32.totalorder %s20, 1
      %s258 = scalar_select %p257, %s20, 1
      %p259 = scmp.lt.s32.totalorder %s21, 1
      %s260 = scalar_select %p259, %s21, 1
      %p261 = scmp.lt.s32.totalorder %s256, 0
      %s262 = scalar_select %p261, %s256, 0
      %s263 = sadd.s32 %s262, %s260
      %s264 = smul.addr %s258, 2
      %s265 = sadd.s32 %s263, %s264
      %s266 = smul.addr %s265, 4
      %s267 = scalar_lea.vmem %s1, %s266
      %p268 = pneg %p99
      %p269 = pneg %p96
      %p270 = scmp.lt.s32.totalorder %s23, %s22
      %s271 = scalar_select %p270, %s23, %s22
      %p272 = scmp.lt.s32.totalorder %s20, 1
      %s273 = scalar_select %p272, %s20, 1
      %p274 = scmp.lt.s32.totalorder %s21, 1
      %s275 = scalar_select %p274, %s21, 1
      %p276 = scmp.lt.s32.totalorder %s271, 0
      %s277 = scalar_select %p276, %s271, 0
      %s278 = sadd.s32 %s277, %s275
      %s279 = smul.addr %s273, 2
      %s280 = sadd.s32 %s278, %s279
      %s281 = smul.addr %s280, 4
      %s282 = scalar_lea.vmem %s2, %s281
      %p283 = pneg %p133
      %p284 = pneg %p130
      %p285 = pneg %p163
      %p286 = pneg %p160
      %s287 = smul.u32 2, %s21
      %p288 = scmp.lt.s32.totalorder %s20, 1
      %s289 = scalar_select %p288, %s20, 1
      %p290 = scmp.lt.s32.totalorder %s287, 3
      %s291 = scalar_select %p290, %s287, 3
      %p292 = scmp.lt.s32.totalorder %s22, 0
      %s293 = scalar_select %p292, %s22, 0
      %s294 = sadd.s32 %s293, %s291
      %s295 = smul.addr %s289, 4
      %s296 = sadd.s32 %s294, %s295
      %s297 = smul.addr %s296, 4
      %s298 = scalar_lea.vmem %s3, %s297
      %s299 = smul.u32 2, %s21
      %p300 = scmp.lt.s32.totalorder %s20, 1
      %s301 = scalar_select %p300, %s20, 1
      %p302 = scmp.lt.s32.totalorder %s299, 3
      %s303 = scalar_select %p302, %s299, 3
      %p304 = scmp.lt.s32.totalorder %s22, 0
      %s305 = scalar_select %p304, %s22, 0
      %s306 = sadd.s32 %s305, %s303
      %s307 = smul.addr %s301, 4
      %s308 = sadd.s32 %s306, %s307
      %s309 = smul.addr %s308, 4
      %s310 = scalar_lea.vmem %s0, %s309
      %s311 = smul.u32 2, %s21
      %p312 = scmp.lt.s32.totalorder %s23, %s22
      %s313 = scalar_select %p312, %s23, %s22
      %p314 = scmp.lt.s32.totalorder %s20, 1
      %s315 = scalar_select %p314, %s20, 1
      %p316 = scmp.lt.s32.totalorder %s21, 1
      %s317 = scalar_select %p316, %s21, 1
      %p318 = scmp.lt.s32.totalorder %s313, 0
      %s319 = scalar_select %p318, %s313, 0
      %s320 = sadd.s32 %s319, %s317
      %s321 = smul.addr %s315, 2
      %s322 = sadd.s32 %s320, %s321
      %s323 = smul.addr %s322, 4
      %s324 = scalar_lea.vmem %s1, %s323
      %p325 = scmp.lt.s32.totalorder %s23, %s22
      %s326 = scalar_select %p325, %s23, %s22
      %p327 = scmp.lt.s32.totalorder %s23, %s22
      %s328 = scalar_select %p327, %s23, %s22
      %p329 = scmp.lt.s32.totalorder %s20, 1
      %s330 = scalar_select %p329, %s20, 1
      %p331 = scmp.lt.s32.totalorder %s21, 1
      %s332 = scalar_select %p331, %s21, 1
      %p333 = scmp.lt.s32.totalorder %s328, 0
      %s334 = scalar_select %p333, %s328, 0
      %s335 = sadd.s32 %s334, %s332
      %s336 = smul.addr %s330, 2
      %s337 = sadd.s32 %s335, %s336
      %s338 = smul.addr %s337, 4
      %s339 = scalar_lea.vmem %s2, %s338
      %p340 = scmp.lt.s32.totalorder %s23, %s22
      %s341 = scalar_select %p340, %s23, %s22
      %s342 = smul.u32 2, %s21
      %p343 = scmp.lt.s32.totalorder %s20, 1
      %s344 = scalar_select %p343, %s20, 1
      %p345 = scmp.lt.s32.totalorder %s342, 3
      %s346 = scalar_select %p345, %s342, 3
      %p347 = scmp.lt.s32.totalorder %s22, 0
      %s348 = scalar_select %p347, %s22, 0
      %s349 = sadd.s32 %s348, %s346
      %s350 = smul.addr %s344, 4
      %s351 = sadd.s32 %s349, %s350
      %s352 = smul.addr %s351, 4
      %s353 = scalar_lea.vmem %s3, %s352
      %s354 = smul.u32 2, %s21
      %p356 = scmp.eq.s32.totalorder %s23, 0
      // Predicated region
      $region33: #{dbrx_model.13} parent=31 // pred_check
        %p357 = pneg %p356
      $region34: #{dbrx_model.13} parent=31 // pred_check_branch
        %359 = sbr.rel (%p357) target = $region36
      $region35: #{dbrx_model.13} parent=31 // pred_region
        %vm360 = vcmask 7168
        %361 = vst.msk [vmem:[#allocation2] sm:$0xff] %vm360, -1e+30
        %362 = vst.msk [vmem:[#allocation2 + $0x8] sm:$0xff] %vm360, -1e+30
        %363 = vst.msk [vmem:[#allocation3] sm:$0xff] %vm360, 0.0
        %364 = vst.msk [vmem:[#allocation3 + $0x8] sm:$0xff] %vm360, 0.0
        %vm365 = vcmask 64512
        %366 = vst.msk [vmem:[#allocation4] sm:$0xff] %vm365, 0.0
        %367 = vst.msk [vmem:[#allocation4 + $0x8] sm:$0xff] %vm365, 0.0
      $region36: #{dbrx_model.13} parent=31 // pred_fallthru
        _
      %p368 = scmp.le.s32.totalorder %s23, %s22
      // Predicated region
      $region37: #{dbrx_model.13} parent=31 // pred_check
        %p369 = pneg %p368
      $region38: #{dbrx_model.13} parent=31 // pred_check_branch
        %371 = sbr.rel (%p369) target = $region40
      $region39: #{dbrx_model.13} parent=31 // pred_region
        %v372 = vld [vmem:[%s310] sm:$0xf]
        %v373 = vld [vmem:[%s310 + $0x4] sm:$0xf]
        %v374 = vld [vmem:[%s324] sm:$0xf]
        %v375 = vld [vmem:[%s339] sm:$0xf]
        %vm376 = vcmask 64512
        %v378 = vsel %vm376, %v372, 0
        %v381 = vsel %vm376, %v374, 0
        %383 = vmatpush.bf16.xpose.msra.mxu0 0
        %384 = vmatpush.bf16.xpose.msra.mxu0 0
        %385 = vmatpush.bf16.xpose.msra.mxu0 0
        %386 = vmatpush.bf16.xpose.msra.mxu0 0
        %387 = vmatpush.bf16.xpose.msra.mxu0 0
        %388 = vmatpush.bf16.xpose.msra.mxu0 0
        %389 = vmatpush.bf16.xpose.msra.mxu0 0
        %390 = vmatpush.bf16.xpose.msra.mxu0 %v381
        %391 = vmatmul.bf16.gmra.mxu0 %v378
        %v392 = vpop.f32.mrf.mxu0
        %v393 = vadd.f32 0.0, %v392
        %v394 = vpop.f32.mrf.mxu0
        %395 = vdwg.mxu0
        %v397 = vsel %vm376, %v373, 0
        %399 = vmatpush.bf16.xpose.msra.mxu0 0
        %400 = vmatpush.bf16.xpose.msra.mxu0 0
        %401 = vmatpush.bf16.xpose.msra.mxu0 0
        %402 = vmatpush.bf16.xpose.msra.mxu0 0
        %403 = vmatpush.bf16.xpose.msra.mxu0 0
        %404 = vmatpush.bf16.xpose.msra.mxu0 0
        %405 = vmatpush.bf16.xpose.msra.mxu0 0
        %406 = vmatpush.bf16.xpose.msra.mxu0 %v381
        %407 = vmatmul.bf16.gmra.mxu0 %v397
        %v408 = vpop.f32.mrf.mxu0
        %v409 = vadd.f32 0.0, %v408
        %v410 = vpop.f32.mrf.mxu0
        %411 = vdwg.mxu0
        %p412 = scmp.eq.s32.totalorder %s23, %s22
        // Predicated region
        $region41: #{dbrx_model.13} parent=39 // pred_check
          %p413 = pneg %p412
        $region42: #{dbrx_model.13} parent=39 // pred_check_branch
          %415 = sbr.rel (%p413) target = $region44
        $region43: #{dbrx_model.13} parent=39 // pred_region
          %v416 = vlaneseq
          %v417 = vshrl.u32 %v416, 7
          %v418 = vlaneseq
          %v419 = vand.u32 %v418, 127
          %vm420 = vcmp.le.s32.totalorder %v419, %v417
          %v421 = vsel %vm420, 1, 0
          %vm422 = vcmp.eq.s32.totalorder %v421, 1
          %v423 = vsel %vm422, %v393, -1e+30
          %v424 = vsel %vm422, %v409, -1e+30
          %v425 = vld [vmem:[#allocation2] sm:$0xff]
          %v426 = vld [vmem:[#allocation2 + $0x8] sm:$0xff]
          %v427 = vsel %vm376, %v423, -inf
          %428 = vmax.xlane.f32.xlu0 %v427
          %v429 = vpop.xlane.xlu0 %428
          %v430 = vsel %vm376, %v424, -inf
          %431 = vmax.xlane.f32.xlu0 %v430
          %v432 = vpop.xlane.xlu0 %431
          %v433 = vmax.f32 %v425, %v429
          %v434 = vmax.f32 %v426, %v432
          %v435 = vsub.f32 %v425, %v433
          %v436 = vsub.f32 %v426, %v434
          %v437 = vmul.f32 %v435, 1.442695
          %v438 = vpow.pop %v437
          %v439 = vmul.f32 %v436, 1.442695
          %v440 = vpow.pop %v439
          %442 = vset.pattern.permute.xlu0 0
          %443 = vperm.xlu0 %442, %v433
          %v444 = vpop.permute.xlu0 %443
          %447 = vset.pattern.permute.xlu0 0
          %448 = vperm.xlu0 %447, %v434
          %v449 = vpop.permute.xlu0 %448
          %v451 = vsub.f32 %v423, %v444
          %v452 = vsub.f32 %v424, %v449
          %v453 = vmul.f32 %v451, 1.442695
          %v454 = vpow.pop %v453
          %v455 = vmul.f32 %v452, 1.442695
          %v456 = vpow.pop %v455
          %v457 = vld [vmem:[#allocation3] sm:$0xff]
          %v458 = vld [vmem:[#allocation3 + $0x8] sm:$0xff]
          %v459 = vmul.f32 %v438, %v457
          %v460 = vmul.f32 %v440, %v458
          %v461 = vsel %vm376, %v454, 0.0
          %462 = vadd.xlane.f32.xlu0 %v461
          %v463 = vpop.xlane.xlu0 %462
          %v464 = vsel %vm376, %v456, 0.0
          %465 = vadd.xlane.f32.xlu0 %v464
          %v466 = vpop.xlane.xlu0 %465
          %v467 = vadd.f32 %v459, %v463
          %v468 = vadd.f32 %v460, %v466
          %vm469 = vcmask 7168
          %470 = vst.msk [vmem:[#allocation3] sm:$0xff] %vm469, %v467
          %471 = vst.msk [vmem:[#allocation3 + $0x8] sm:$0xff] %vm469, %v468
          %v472 = vld [vmem:[#allocation4] sm:$0xff]
          %v473 = vld [vmem:[#allocation4 + $0x8] sm:$0xff]
          %475 = vset.pattern.permute.xlu0 0
          %476 = vperm.xlu0 %475, %v438
          %v477 = vpop.permute.xlu0 %476
          %480 = vset.pattern.permute.xlu0 0
          %481 = vperm.xlu0 %480, %v440
          %v482 = vpop.permute.xlu0 %481
          %v484 = vmul.f32 %v477, %v472
          %v485 = vmul.f32 %v482, %v473
          %v486 = vpack.c.bf16 %v454, %v454
          %v487 = vpack.c.bf16 %v456, %v456
          %v489 = vsel %vm376, %v486, 0
          %vm491 = vcmask 1043456
          %v493 = vsel %vm491, %v375, 0
          %495 = vmatpush.bf16.msra.mxu0 0
          %496 = vmatpush.bf16.msra.mxu0 0
          %497 = vmatpush.bf16.msra.mxu0 0
          %498 = vmatpush.bf16.msra.mxu0 0
          %499 = vmatpush.bf16.msra.mxu0 0
          %500 = vmatpush.bf16.msra.mxu0 0
          %501 = vmatpush.bf16.msra.mxu0 0
          %502 = vmatpush.bf16.msra.mxu0 %v493
          %503 = vmatmul.bf16.gmra.mxu0 %v489
          %v504 = vpop.f32.mrf.mxu0
          %v505 = vadd.f32 0.0, %v504
          %v506 = vpop.f32.mrf.mxu0
          %507 = vdwg.mxu0
          %v509 = vsel %vm376, %v487, 0
          %511 = vmatpush.bf16.msra.mxu0 0
          %512 = vmatpush.bf16.msra.mxu0 0
          %513 = vmatpush.bf16.msra.mxu0 0
          %514 = vmatpush.bf16.msra.mxu0 0
          %515 = vmatpush.bf16.msra.mxu0 0
          %516 = vmatpush.bf16.msra.mxu0 0
          %517 = vmatpush.bf16.msra.mxu0 0
          %518 = vmatpush.bf16.msra.mxu0 %v493
          %519 = vmatmul.bf16.gmra.mxu0 %v509
          %v520 = vpop.f32.mrf.mxu0
          %v521 = vadd.f32 0.0, %v520
          %v522 = vpop.f32.mrf.mxu0
          %523 = vdwg.mxu0
          %v524 = vadd.f32 %v484, %v505
          %v525 = vadd.f32 %v485, %v521
          %526 = vst.msk [vmem:[#allocation4] sm:$0xff] %vm376, %v524
          %527 = vst.msk [vmem:[#allocation4 + $0x8] sm:$0xff] %vm376, %v525
          %528 = vst.msk [vmem:[#allocation2] sm:$0xff] %vm469, %v433
          %529 = vst.msk [vmem:[#allocation2 + $0x8] sm:$0xff] %vm469, %v434
        $region44: #{dbrx_model.13} parent=39 // pred_fallthru
          _
        %p530 = scmp.lt.s32.totalorder %s23, %s22
        // Predicated region
        $region45: #{dbrx_model.13} parent=39 // pred_check
          %p531 = pneg %p530
        $region46: #{dbrx_model.13} parent=39 // pred_check_branch
          %533 = sbr.rel (%p531) target = $region48
        $region47: #{dbrx_model.13} parent=39 // pred_region
          %v534 = vld [vmem:[#allocation2] sm:$0xff]
          %v535 = vld [vmem:[#allocation2 + $0x8] sm:$0xff]
          %v536 = vsel %vm376, %v393, -inf
          %537 = vmax.xlane.f32.xlu0 %v536
          %v538 = vpop.xlane.xlu0 %537
          %v539 = vsel %vm376, %v409, -inf
          %540 = vmax.xlane.f32.xlu0 %v539
          %v541 = vpop.xlane.xlu0 %540
          %v542 = vmax.f32 %v534, %v538
          %v543 = vmax.f32 %v535, %v541
          %v544 = vsub.f32 %v534, %v542
          %v545 = vsub.f32 %v535, %v543
          %v546 = vmul.f32 %v544, 1.442695
          %v547 = vpow.pop %v546
          %v548 = vmul.f32 %v545, 1.442695
          %v549 = vpow.pop %v548
          %551 = vset.pattern.permute.xlu0 0
          %552 = vperm.xlu0 %551, %v542
          %v553 = vpop.permute.xlu0 %552
          %556 = vset.pattern.permute.xlu0 0
          %557 = vperm.xlu0 %556, %v543
          %v558 = vpop.permute.xlu0 %557
          %v560 = vsub.f32 %v393, %v553
          %v561 = vsub.f32 %v409, %v558
          %v562 = vmul.f32 %v560, 1.442695
          %v563 = vpow.pop %v562
          %v564 = vmul.f32 %v561, 1.442695
          %v565 = vpow.pop %v564
          %v566 = vld [vmem:[#allocation3] sm:$0xff]
          %v567 = vld [vmem:[#allocation3 + $0x8] sm:$0xff]
          %v568 = vmul.f32 %v547, %v566
          %v569 = vmul.f32 %v549, %v567
          %v570 = vsel %vm376, %v563, 0.0
          %571 = vadd.xlane.f32.xlu0 %v570
          %v572 = vpop.xlane.xlu0 %571
          %v573 = vsel %vm376, %v565, 0.0
          %574 = vadd.xlane.f32.xlu0 %v573
          %v575 = vpop.xlane.xlu0 %574
          %v576 = vadd.f32 %v568, %v572
          %v577 = vadd.f32 %v569, %v575
          %vm578 = vcmask 7168
          %579 = vst.msk [vmem:[#allocation3] sm:$0xff] %vm578, %v576
          %580 = vst.msk [vmem:[#allocation3 + $0x8] sm:$0xff] %vm578, %v577
          %v581 = vld [vmem:[#allocation4] sm:$0xff]
          %v582 = vld [vmem:[#allocation4 + $0x8] sm:$0xff]
          %584 = vset.pattern.permute.xlu0 0
          %585 = vperm.xlu0 %584, %v547
          %v586 = vpop.permute.xlu0 %585
          %589 = vset.pattern.permute.xlu0 0
          %590 = vperm.xlu0 %589, %v549
          %v591 = vpop.permute.xlu0 %590
          %v593 = vmul.f32 %v586, %v581
          %v594 = vmul.f32 %v591, %v582
          %v595 = vpack.c.bf16 %v563, %v563
          %v596 = vpack.c.bf16 %v565, %v565
          %v598 = vsel %vm376, %v595, 0
          %vm600 = vcmask 1043456
          %v602 = vsel %vm600, %v375, 0
          %604 = vmatpush.bf16.msra.mxu0 0
          %605 = vmatpush.bf16.msra.mxu0 0
          %606 = vmatpush.bf16.msra.mxu0 0
          %607 = vmatpush.bf16.msra.mxu0 0
          %608 = vmatpush.bf16.msra.mxu0 0
          %609 = vmatpush.bf16.msra.mxu0 0
          %610 = vmatpush.bf16.msra.mxu0 0
          %611 = vmatpush.bf16.msra.mxu0 %v602
          %612 = vmatmul.bf16.gmra.mxu0 %v598
          %v613 = vpop.f32.mrf.mxu0
          %v614 = vadd.f32 0.0, %v613
          %v615 = vpop.f32.mrf.mxu0
          %616 = vdwg.mxu0
          %v618 = vsel %vm376, %v596, 0
          %620 = vmatpush.bf16.msra.mxu0 0
          %621 = vmatpush.bf16.msra.mxu0 0
          %622 = vmatpush.bf16.msra.mxu0 0
          %623 = vmatpush.bf16.msra.mxu0 0
          %624 = vmatpush.bf16.msra.mxu0 0
          %625 = vmatpush.bf16.msra.mxu0 0
          %626 = vmatpush.bf16.msra.mxu0 0
          %627 = vmatpush.bf16.msra.mxu0 %v602
          %628 = vmatmul.bf16.gmra.mxu0 %v618
          %v629 = vpop.f32.mrf.mxu0
          %v630 = vadd.f32 0.0, %v629
          %v631 = vpop.f32.mrf.mxu0
          %632 = vdwg.mxu0
          %v633 = vadd.f32 %v593, %v614
          %v634 = vadd.f32 %v594, %v630
          %635 = vst.msk [vmem:[#allocation4] sm:$0xff] %vm376, %v633
          %636 = vst.msk [vmem:[#allocation4 + $0x8] sm:$0xff] %vm376, %v634
          %637 = vst.msk [vmem:[#allocation2] sm:$0xff] %vm578, %v542
          %638 = vst.msk [vmem:[#allocation2 + $0x8] sm:$0xff] %vm578, %v543
        $region48: #{dbrx_model.13} parent=39 // pred_fallthru
          _
      $region40: #{dbrx_model.13} parent=31 // pred_fallthru
        _
      // Predicated region
      $region49: #{dbrx_model.13} parent=31 // pred_check
        %p639 = pneg %p356
      $region50: #{dbrx_model.13} parent=31 // pred_check_branch
        %641 = sbr.rel (%p639) target = $region52
      $region51: #{dbrx_model.13} parent=31 // pred_region
        %v642 = vld [vmem:[#allocation3] sm:$0xff]
        %v643 = vld [vmem:[#allocation3 + $0x8] sm:$0xff]
        %v644 = vrcp.pop %v642
        %v645 = vrcp.pop %v643
        %v646 = vld [vmem:[#allocation4] sm:$0xff]
        %v647 = vld [vmem:[#allocation4 + $0x8] sm:$0xff]
        %649 = vset.pattern.permute.xlu0 0
        %650 = vperm.xlu0 %649, %v644
        %v651 = vpop.permute.xlu0 %650
        %654 = vset.pattern.permute.xlu0 0
        %655 = vperm.xlu0 %654, %v645
        %v656 = vpop.permute.xlu0 %655
        %v658 = vmul.f32 %v646, %v651
        %v659 = vmul.f32 %v647, %v656
        %v660 = vpack.c.bf16 %v658, %v658
        %v661 = vpack.c.bf16 %v659, %v659
        %vm662 = vcmask 60416
        %663 = vst.msk [vmem:[%s353] sm:$0xf] %vm662, %v660
        %664 = vst.msk [vmem:[%s353 + $0x4] sm:$0xf] %vm662, %v661
      $region52: #{dbrx_model.13} parent=31 // pred_fallthru
        _
      %s665 = smul.u32 2, %s21
      %p666 = scmp.lt.s32.totalorder %s20, 1
      %s667 = scalar_select %p666, %s20, 1
      %p668 = scmp.lt.s32.totalorder %s665, 3
      %s669 = scalar_select %p668, %s665, 3
      %p670 = scmp.lt.s32.totalorder %s22, 0
      %s671 = scalar_select %p670, %s22, 0
      %s672 = sadd.s32 %s671, %s669
      %s673 = smul.addr %s667, 4
      %s674 = sadd.s32 %s672, %s673
      %s675 = smul.addr %s674, 4
      %s676 = scalar_lea.vmem %s3, %s675
      // Predicated region
      $region53: #{dbrx_model.13} parent=31 // pred_check
        %p677 = pneg %p160
      $region54: #{dbrx_model.13} parent=31 // pred_check_branch
        %679 = sbr.rel (%p677) target = $region56
      $region55: #{dbrx_model.13} parent=31 // pred_region
        %s680 = smul.u32 2, %s21
      $region56: #{dbrx_model.13} parent=31 // pred_fallthru
        _
    $region32: #{dbrx_model.13} parent=5 // pred_fallthru
      _
    %p681 = scmp.le.s32.totalorder 2, %s9
    // Predicated region
    $region57: #{dbrx_model.13} parent=5 // pred_check
      %p682 = pneg %p681
    $region58: #{dbrx_model.13} parent=5 // pred_check_branch
      %684 = sbr.rel (%p682) target = $region60
    $region59: #{dbrx_model.13} parent=5 // pred_region
      %s685 = ssub.s32 %s9, 2
      // Predicated region
      $region61: #{dbrx_model.13} parent=59 // pred_check
        %p686 = pneg %p166
      $region62: #{dbrx_model.13} parent=59 // pred_check_branch
        %688 = sbr.rel (%p686) target = $region64
      $region63: #{dbrx_model.13} parent=59 // pred_region
        %s689 = smul.u32 2, %s25
        %p690 = scmp.lt.s32.totalorder %s24, 1
        %s691 = scalar_select %p690, %s24, 1
        %p692 = scmp.lt.s32.totalorder %s689, 3
        %s693 = scalar_select %p692, %s689, 3
        %p694 = scmp.lt.s32.totalorder %s26, 0
        %s695 = scalar_select %p694, %s26, 0
        %s696 = sadd.s32 %s695, %s693
        %s697 = smul.addr %s691, 4
        %s698 = sadd.s32 %s696, %s697
        %s699 = smul.addr %s698, 4
        %s700 = scalar_lea.vmem %s3, %s699
      $region64: #{dbrx_model.13} parent=59 // pred_fallthru
        _
    $region60: #{dbrx_model.13} parent=5 // pred_fallthru
      _
  $region6: #{dbrx_model.13} parent=0 // loop_footer
    %s13 = sadd.s32 1, %s9
  $region7: #{dbrx_model.13} parent=0 // loop_footer_branch
    %8 = sbr.rel target = $region3
  $region8: #{dbrx_model.13} parent=0 // loop_exit
    _

// kernel: dbrx_model.15
$region0: #{dbrx_model.15}
  #allocation0 [shape = 'u32[]', space=smem, size = 0x4, offset = 0x4, fixed_abs, tag = 'smem constant byte address 0x4 - core index']
  #allocation1 [shape = 'u32[72,128]{1,0:T(1,128)}', space=vmem, size = 0x9000, scoped, tag = 'internal scratch']
  #allocation2 [shape = 'f32[16,32]{1,0:T(8,128)}', space=vmem, size = 0x2000, scoped, tag = 'scratch operand']
  %s0 = inlined_call_operand.vmem [shape: bf16[16,32], index: 0, kind: input, shape index: {}]
  %s1 = inlined_call_operand.vmem [shape: bf16[4,32,64], index: 1, kind: input, shape index: {}]
  %s2 = inlined_call_operand.vmem [shape: bf16[4,32,64], index: 2, kind: input, shape index: {}]
  %s3 = inlined_call_operand.vmem [shape: bf16[4,64,32], index: 3, kind: input, shape index: {}]
  %s4 = inlined_call_operand.vmem [shape: f32[4,16,1], index: 4, kind: input, shape index: {}]
  %s5 = inlined_call_operand.vmem [shape: bf16[16,32], index: 5, kind: input, shape index: {}]
  %s6 = inlined_call_operand.vmem [shape: bf16[16,32], index: 6, kind: output, shape index: {}]
  %s7 = sld [smem:[#allocation0]]
  $region65: #{dbrx_model.15} parent=0
    _
  %s9 = ssub.s32 1, %s7
  %s10 = scalar_select 0, %s9, %s7
  loop: start=0, step=1, limit=6
  $region2: #{dbrx_model.15} parent=0 // loop_pre_header
    _
  $region3: #{dbrx_model.15} parent=0 // loop_header
    %s12 = sphi 0, %s16
    %p13 = scmp.ge.s32.totalorder %s12, 6
    %s19 = sphi 0, %s38
    %s20 = sphi 0, %s34
    %s21 = sphi 0, %s30
    %s22 = sphi 0, %s19
    %s23 = sphi 0, %s20
    %s24 = sphi 0, %s21
    %s25 = sphi 0, %s22
    %s26 = sphi 0, %s23
    %s27 = sphi 0, %s24
    %s41 = sphi 0, %s43
    %s44 = sphi 0, %s41
    %s45 = sphi 0, %s44
    %s61 = sphi 0, %s45
    %s69 = sphi 0, %s71
    %s72 = sphi 0, %s69
    %s73 = sphi 0, %s72
    %s89 = sphi 0, %s73
    %s97 = sphi 0, %s99
    %s100 = sphi 0, %s97
    %s101 = sphi 0, %s100
    %s117 = sphi 0, %s101
    %s125 = sphi 0, %s127
    %s128 = sphi 0, %s125
    %s129 = sphi 0, %s128
    %s145 = sphi 0, %s129
    %s153 = sphi 0, %s155
    %s156 = sphi 0, %s153
    %s157 = sphi 0, %s156
    %s173 = sphi 0, %s157
    %s179 = sphi 0, %s181
    %s182 = sphi 0, %s179
    %s183 = sphi 0, %s182
    %s199 = sphi 0, %s183
    %s205 = sphi 0, %s207
    %s208 = sphi 0, %s205
    %s209 = sphi 0, %s208
    %s225 = sphi 0, %s209
  $region4: #{dbrx_model.15} parent=0 // loop_header_branch
    %15 = sbr.rel (%p13) target = $region8
  $region5: #{dbrx_model.15} parent=0 // loop_body
    %s17 = ssub.s32 %s12, 1
    %s18 = ssub.s32 %s12, 2
    %s28 = sadd.s32 1, %s21
    %p29 = scmp.ge.s32.totalorder %s28, 1
    %s30 = scalar_select %p29, 0, %s28
    %s31 = sadd.s32 1, %s20
    %s32 = scalar_select %p29, %s31, %s20
    %p33 = scmp.ge.s32.totalorder %s32, 4
    %s34 = scalar_select %p33, 0, %s32
    %s35 = sadd.s32 1, %s19
    %s36 = scalar_select %p33, %s35, %s19
    %p37 = scmp.ge.s32.totalorder %s36, 1
    %s38 = scalar_select %p37, 0, %s36
    %s39 = ssub.s32 %s19, %s38
    %p40 = scmp.eq.s32.totalorder %s39, 0
    %s42 = sadd.s32 %s41, 1
    %s43 = scalar_select %p40, %s41, %s42
    %p46 = pneg %p40
    %p47 = scmp.eq.s32.totalorder %s12, 3
    %p48 = por %p46, %p47
    %p49 = scmp.ne.s32.totalorder %s41, %s44
    %p50 = scmp.eq.s32.totalorder %s12, 0
    %p51 = por %p49, %p50
    %p52 = scmp.ne.s32.totalorder %s41, %s44
    %p53 = scmp.eq.s32.totalorder %s17, 3
    %p54 = por %p52, %p53
    %p55 = scmp.ne.s32.totalorder %s44, %s45
    %p56 = scmp.eq.s32.totalorder %s17, 0
    %p57 = por %p55, %p56
    %p58 = scmp.ne.s32.totalorder %s44, %s45
    %p59 = scmp.eq.s32.totalorder %s18, 3
    %p60 = por %p58, %p59
    %p62 = scmp.ne.s32.totalorder %s45, %s61
    %p63 = scmp.eq.s32.totalorder %s18, 0
    %p64 = por %p62, %p63
    %s65 = ssub.s32 %s20, %s34
    %s66 = ssub.s32 %s21, %s30
    %s67 = sor.u32 %s65, %s66
    %p68 = scmp.eq.s32.totalorder %s67, 0
    %s70 = sadd.s32 %s69, 1
    %s71 = scalar_select %p68, %s69, %s70
    %p74 = pneg %p68
    %p75 = scmp.eq.s32.totalorder %s12, 3
    %p76 = por %p74, %p75
    %p77 = scmp.ne.s32.totalorder %s69, %s72
    %p78 = scmp.eq.s32.totalorder %s12, 0
    %p79 = por %p77, %p78
    %p80 = scmp.ne.s32.totalorder %s69, %s72
    %p81 = scmp.eq.s32.totalorder %s17, 3
    %p82 = por %p80, %p81
    %p83 = scmp.ne.s32.totalorder %s72, %s73
    %p84 = scmp.eq.s32.totalorder %s17, 0
    %p85 = por %p83, %p84
    %p86 = scmp.ne.s32.totalorder %s72, %s73
    %p87 = scmp.eq.s32.totalorder %s18, 3
    %p88 = por %p86, %p87
    %p90 = scmp.ne.s32.totalorder %s73, %s89
    %p91 = scmp.eq.s32.totalorder %s18, 0
    %p92 = por %p90, %p91
    %s93 = ssub.s32 %s20, %s34
    %s94 = ssub.s32 %s21, %s30
    %s95 = sor.u32 %s93, %s94
    %p96 = scmp.eq.s32.totalorder %s95, 0
    %s98 = sadd.s32 %s97, 1
    %s99 = scalar_select %p96, %s97, %s98
    %p102 = pneg %p96
    %p103 = scmp.eq.s32.totalorder %s12, 3
    %p104 = por %p102, %p103
    %p105 = scmp.ne.s32.totalorder %s97, %s100
    %p106 = scmp.eq.s32.totalorder %s12, 0
    %p107 = por %p105, %p106
    %p108 = scmp.ne.s32.totalorder %s97, %s100
    %p109 = scmp.eq.s32.totalorder %s17, 3
    %p110 = por %p108, %p109
    %p111 = scmp.ne.s32.totalorder %s100, %s101
    %p112 = scmp.eq.s32.totalorder %s17, 0
    %p113 = por %p111, %p112
    %p114 = scmp.ne.s32.totalorder %s100, %s101
    %p115 = scmp.eq.s32.totalorder %s18, 3
    %p116 = por %p114, %p115
    %p118 = scmp.ne.s32.totalorder %s101, %s117
    %p119 = scmp.eq.s32.totalorder %s18, 0
    %p120 = por %p118, %p119
    %s121 = ssub.s32 %s20, %s34
    %s122 = ssub.s32 %s21, %s30
    %s123 = sor.u32 %s121, %s122
    %p124 = scmp.eq.s32.totalorder %s123, 0
    %s126 = sadd.s32 %s125, 1
    %s127 = scalar_select %p124, %s125, %s126
    %p130 = pneg %p124
    %p131 = scmp.eq.s32.totalorder %s12, 3
    %p132 = por %p130, %p131
    %p133 = scmp.ne.s32.totalorder %s125, %s128
    %p134 = scmp.eq.s32.totalorder %s12, 0
    %p135 = por %p133, %p134
    %p136 = scmp.ne.s32.totalorder %s125, %s128
    %p137 = scmp.eq.s32.totalorder %s17, 3
    %p138 = por %p136, %p137
    %p139 = scmp.ne.s32.totalorder %s128, %s129
    %p140 = scmp.eq.s32.totalorder %s17, 0
    %p141 = por %p139, %p140
    %p142 = scmp.ne.s32.totalorder %s128, %s129
    %p143 = scmp.eq.s32.totalorder %s18, 3
    %p144 = por %p142, %p143
    %p146 = scmp.ne.s32.totalorder %s129, %s145
    %p147 = scmp.eq.s32.totalorder %s18, 0
    %p148 = por %p146, %p147
    %s149 = ssub.s32 %s20, %s34
    %s150 = ssub.s32 %s19, %s38
    %s151 = sor.u32 %s149, %s150
    %p152 = scmp.eq.s32.totalorder %s151, 0
    %s154 = sadd.s32 %s153, 1
    %s155 = scalar_select %p152, %s153, %s154
    %p158 = pneg %p152
    %p159 = scmp.eq.s32.totalorder %s12, 3
    %p160 = por %p158, %p159
    %p161 = scmp.ne.s32.totalorder %s153, %s156
    %p162 = scmp.eq.s32.totalorder %s12, 0
    %p163 = por %p161, %p162
    %p164 = scmp.ne.s32.totalorder %s153, %s156
    %p165 = scmp.eq.s32.totalorder %s17, 3
    %p166 = por %p164, %p165
    %p167 = scmp.ne.s32.totalorder %s156, %s157
    %p168 = scmp.eq.s32.totalorder %s17, 0
    %p169 = por %p167, %p168
    %p170 = scmp.ne.s32.totalorder %s156, %s157
    %p171 = scmp.eq.s32.totalorder %s18, 3
    %p172 = por %p170, %p171
    %p174 = scmp.ne.s32.totalorder %s157, %s173
    %p175 = scmp.eq.s32.totalorder %s18, 0
    %p176 = por %p174, %p175
    %s177 = ssub.s32 %s19, %s38
    %p178 = scmp.eq.s32.totalorder %s177, 0
    %s180 = sadd.s32 %s179, 1
    %s181 = scalar_select %p178, %s179, %s180
    %p184 = pneg %p178
    %p185 = scmp.eq.s32.totalorder %s12, 3
    %p186 = por %p184, %p185
    %p187 = scmp.ne.s32.totalorder %s179, %s182
    %p188 = scmp.eq.s32.totalorder %s12, 0
    %p189 = por %p187, %p188
    %p190 = scmp.ne.s32.totalorder %s179, %s182
    %p191 = scmp.eq.s32.totalorder %s17, 3
    %p192 = por %p190, %p191
    %p193 = scmp.ne.s32.totalorder %s182, %s183
    %p194 = scmp.eq.s32.totalorder %s17, 0
    %p195 = por %p193, %p194
    %p196 = scmp.ne.s32.totalorder %s182, %s183
    %p197 = scmp.eq.s32.totalorder %s18, 3
    %p198 = por %p196, %p197
    %p200 = scmp.ne.s32.totalorder %s183, %s199
    %p201 = scmp.eq.s32.totalorder %s18, 0
    %p202 = por %p200, %p201
    %s203 = ssub.s32 %s19, %s38
    %p204 = scmp.eq.s32.totalorder %s203, 0
    %s206 = sadd.s32 %s205, 1
    %s207 = scalar_select %p204, %s205, %s206
    %p210 = pneg %p204
    %p211 = scmp.eq.s32.totalorder %s12, 3
    %p212 = por %p210, %p211
    %p213 = scmp.ne.s32.totalorder %s205, %s208
    %p214 = scmp.eq.s32.totalorder %s12, 0
    %p215 = por %p213, %p214
    %p216 = scmp.ne.s32.totalorder %s205, %s208
    %p217 = scmp.eq.s32.totalorder %s17, 3
    %p218 = por %p216, %p217
    %p219 = scmp.ne.s32.totalorder %s208, %s209
    %p220 = scmp.eq.s32.totalorder %s17, 0
    %p221 = por %p219, %p220
    %p222 = scmp.ne.s32.totalorder %s208, %s209
    %p223 = scmp.eq.s32.totalorder %s18, 3
    %p224 = por %p222, %p223
    %p226 = scmp.ne.s32.totalorder %s209, %s225
    %p227 = scmp.eq.s32.totalorder %s18, 0
    %p228 = por %p226, %p227
    %p229 = scmp.le.s32.totalorder 1, %s12
    %p230 = scmp.lt.s32.totalorder %s12, 5
    %p231 = pnand %p229, %p230
    %p232 = pneg %p231
    // Predicated region
    $region9: #{dbrx_model.15} parent=5 // pred_check
      _
    $region10: #{dbrx_model.15} parent=5 // pred_check_branch
      %234 = sbr.rel (%p231) target = $region12
    $region11: #{dbrx_model.15} parent=5 // pred_region
      %s235 = ssub.s32 %s12, 1
      // Predicated region
      $region13: #{dbrx_model.15} parent=11 // pred_check
        %p236 = pneg %p57
      $region14: #{dbrx_model.15} parent=11 // pred_check_branch
        %238 = sbr.rel (%p236) target = $region16
      $region15: #{dbrx_model.15} parent=11 // pred_region
        %s239 = smul.u32 2, %s22
        %p240 = scmp.lt.s32.totalorder %s239, 1
        %s241 = scalar_select %p240, %s239, 1
        %s242 = smul.addr %s241, 4
        %s243 = scalar_lea.vmem %s0, %s242
        %s244 = smul.u32 2, %s22
      $region16: #{dbrx_model.15} parent=11 // pred_fallthru
        _
      // Predicated region
      $region17: #{dbrx_model.15} parent=11 // pred_check
        %p245 = pneg %p195
      $region18: #{dbrx_model.15} parent=11 // pred_check_branch
        %247 = sbr.rel (%p245) target = $region20
      $region19: #{dbrx_model.15} parent=11 // pred_region
        %s248 = smul.u32 2, %s22
        %p249 = scmp.lt.s32.totalorder %s248, 1
        %s250 = scalar_select %p249, %s248, 1
        %s251 = smul.addr %s250, 4
        %s252 = scalar_lea.vmem %s5, %s251
        %s253 = smul.u32 2, %s22
      $region20: #{dbrx_model.15} parent=11 // pred_fallthru
        _
    $region12: #{dbrx_model.15} parent=5 // pred_fallthru
      _
    %p254 = scmp.lt.s32.totalorder %s12, 4
    // Predicated region
    $region21: #{dbrx_model.15} parent=5 // pred_check
      %p255 = pneg %p254
    $region22: #{dbrx_model.15} parent=5 // pred_check_branch
      %257 = sbr.rel (%p255) target = $region24
    $region23: #{dbrx_model.15} parent=5 // pred_region
      // Predicated region
      $region25: #{dbrx_model.15} parent=23 // pred_check
        %p258 = pneg %p79
      $region26: #{dbrx_model.15} parent=23 // pred_check_branch
        %260 = sbr.rel (%p258) target = $region28
      $region27: #{dbrx_model.15} parent=23 // pred_region
        %p261 = scmp.lt.s32.totalorder %s20, 3
        %s262 = scalar_select %p261, %s20, 3
        %p263 = scmp.lt.s32.totalorder %s21, 0
        %s264 = scalar_select %p263, %s21, 0
        %s265 = smul.addr %s262, 4
        %s266 = sadd.s32 %s264, %s265
        %s267 = smul.addr %s266, 4
        %s268 = scalar_lea.vmem %s1, %s267
      $region28: #{dbrx_model.15} parent=23 // pred_fallthru
        _
      // Predicated region
      $region29: #{dbrx_model.15} parent=23 // pred_check
        %p269 = pneg %p107
      $region30: #{dbrx_model.15} parent=23 // pred_check_branch
        %271 = sbr.rel (%p269) target = $region32
      $region31: #{dbrx_model.15} parent=23 // pred_region
        %p272 = scmp.lt.s32.totalorder %s20, 3
        %s273 = scalar_select %p272, %s20, 3
        %p274 = scmp.lt.s32.totalorder %s21, 0
        %s275 = scalar_select %p274, %s21, 0
        %s276 = smul.addr %s273, 4
        %s277 = sadd.s32 %s275, %s276
        %s278 = smul.addr %s277, 4
        %s279 = scalar_lea.vmem %s2, %s278
      $region32: #{dbrx_model.15} parent=23 // pred_fallthru
        _
      // Predicated region
      $region33: #{dbrx_model.15} parent=23 // pred_check
        %p280 = pneg %p135
      $region34: #{dbrx_model.15} parent=23 // pred_check_branch
        %282 = sbr.rel (%p280) target = $region36
      $region35: #{dbrx_model.15} parent=23 // pred_region
        %s283 = smul.u32 8, %s21
        %p284 = scmp.lt.s32.totalorder %s20, 3
        %s285 = scalar_select %p284, %s20, 3
        %p286 = scmp.lt.s32.totalorder %s283, 7
        %s287 = scalar_select %p286, %s283, 7
        %s288 = smul.addr %s285, 8
        %s289 = sadd.s32 %s287, %s288
        %s290 = smul.addr %s289, 4
        %s291 = scalar_lea.vmem %s3, %s290
        %s292 = smul.u32 8, %s21
      $region36: #{dbrx_model.15} parent=23 // pred_fallthru
        _
      // Predicated region
      $region37: #{dbrx_model.15} parent=23 // pred_check
        %p293 = pneg %p163
      $region38: #{dbrx_model.15} parent=23 // pred_check_branch
        %295 = sbr.rel (%p293) target = $region40
      $region39: #{dbrx_model.15} parent=23 // pred_region
        %s296 = smul.u32 2, %s19
        %p297 = scmp.lt.s32.totalorder %s20, 3
        %s298 = scalar_select %p297, %s20, 3
        %p299 = scmp.lt.s32.totalorder %s296, 1
        %s300 = scalar_select %p299, %s296, 1
        %s301 = smul.addr %s298, 2
        %s302 = sadd.s32 %s300, %s301
        %s303 = smul.addr %s302, 8
        %s304 = scalar_lea.vmem %s4, %s303
        %s305 = smul.u32 2, %s19
      $region40: #{dbrx_model.15} parent=23 // pred_fallthru
        _
    $region24: #{dbrx_model.15} parent=5 // pred_fallthru
      _
    %p306 = scmp.le.s32.totalorder 1, %s12
    %p307 = scmp.lt.s32.totalorder %s12, 5
    %p308 = pnand %p306, %p307
    %p309 = pneg %p308
    // Predicated region
    $region41: #{dbrx_model.15} parent=5 // pred_check
      _
    $region42: #{dbrx_model.15} parent=5 // pred_check_branch
      %311 = sbr.rel (%p308) target = $region44
    $region43: #{dbrx_model.15} parent=5 // pred_region
      %s312 = ssub.s32 %s12, 1
      %s313 = smul.u32 2, %s22
      %p314 = scmp.lt.s32.totalorder %s313, 1
      %s315 = scalar_select %p314, %s313, 1
      %s316 = smul.addr %s315, 4
      %s317 = scalar_lea.vmem %s0, %s316
      %p318 = pneg %p57
      %p319 = pneg %p54
      %p320 = scmp.lt.s32.totalorder %s23, 3
      %s321 = scalar_select %p320, %s23, 3
      %p322 = scmp.lt.s32.totalorder %s24, 0
      %s323 = scalar_select %p322, %s24, 0
      %s324 = smul.addr %s321, 4
      %s325 = sadd.s32 %s323, %s324
      %s326 = smul.addr %s325, 4
      %s327 = scalar_lea.vmem %s1, %s326
      %p328 = pneg %p85
      %p329 = pneg %p82
      %p330 = scmp.lt.s32.totalorder %s23, 3
      %s331 = scalar_select %p330, %s23, 3
      %p332 = scmp.lt.s32.totalorder %s24, 0
      %s333 = scalar_select %p332, %s24, 0
      %s334 = smul.addr %s331, 4
      %s335 = sadd.s32 %s333, %s334
      %s336 = smul.addr %s335, 4
      %s337 = scalar_lea.vmem %s2, %s336
      %p338 = pneg %p113
      %p339 = pneg %p110
      %s340 = smul.u32 8, %s24
      %p341 = scmp.lt.s32.totalorder %s23, 3
      %s342 = scalar_select %p341, %s23, 3
      %p343 = scmp.lt.s32.totalorder %s340, 7
      %s344 = scalar_select %p343, %s340, 7
      %s345 = smul.addr %s342, 8
      %s346 = sadd.s32 %s344, %s345
      %s347 = smul.addr %s346, 4
      %s348 = scalar_lea.vmem %s3, %s347
      %p349 = pneg %p141
      %p350 = pneg %p138
      %s351 = smul.u32 2, %s22
      %p352 = scmp.lt.s32.totalorder %s23, 3
      %s353 = scalar_select %p352, %s23, 3
      %p354 = scmp.lt.s32.totalorder %s351, 1
      %s355 = scalar_select %p354, %s351, 1
      %s356 = smul.addr %s353, 2
      %s357 = sadd.s32 %s355, %s356
      %s358 = smul.addr %s357, 8
      %s359 = scalar_lea.vmem %s4, %s358
      %p360 = pneg %p169
      %p361 = pneg %p166
      %s362 = smul.u32 2, %s22
      %p363 = scmp.lt.s32.totalorder %s362, 1
      %s364 = scalar_select %p363, %s362, 1
      %s365 = smul.addr %s364, 4
      %s366 = scalar_lea.vmem %s5, %s365
      %p367 = pneg %p195
      %p368 = pneg %p192
      %p369 = pneg %p221
      %p370 = pneg %p218
      %s371 = smul.u32 2, %s22
      %p372 = scmp.lt.s32.totalorder %s371, 1
      %s373 = scalar_select %p372, %s371, 1
      %s374 = smul.addr %s373, 4
      %s375 = scalar_lea.vmem %s6, %s374
      %s376 = smul.u32 2, %s22
      %p377 = scmp.lt.s32.totalorder %s376, 1
      %s378 = scalar_select %p377, %s376, 1
      %s379 = smul.addr %s378, 4
      %s380 = scalar_lea.vmem %s0, %s379
      %s381 = smul.u32 2, %s22
      %p382 = scmp.lt.s32.totalorder %s23, 3
      %s383 = scalar_select %p382, %s23, 3
      %p384 = scmp.lt.s32.totalorder %s24, 0
      %s385 = scalar_select %p384, %s24, 0
      %s386 = smul.addr %s383, 4
      %s387 = sadd.s32 %s385, %s386
      %s388 = smul.addr %s387, 4
      %s389 = scalar_lea.vmem %s1, %s388
      %p390 = scmp.lt.s32.totalorder %s23, 3
      %s391 = scalar_select %p390, %s23, 3
      %p392 = scmp.lt.s32.totalorder %s24, 0
      %s393 = scalar_select %p392, %s24, 0
      %s394 = smul.addr %s391, 4
      %s395 = sadd.s32 %s393, %s394
      %s396 = smul.addr %s395, 4
      %s397 = scalar_lea.vmem %s2, %s396
      %s398 = smul.u32 8, %s24
      %p399 = scmp.lt.s32.totalorder %s23, 3
      %s400 = scalar_select %p399, %s23, 3
      %p401 = scmp.lt.s32.totalorder %s398, 7
      %s402 = scalar_select %p401, %s398, 7
      %s403 = smul.addr %s400, 8
      %s404 = sadd.s32 %s402, %s403
      %s405 = smul.addr %s404, 4
      %s406 = scalar_lea.vmem %s3, %s405
      %s407 = smul.u32 8, %s24
      %s408 = smul.u32 2, %s22
      %p409 = scmp.lt.s32.totalorder %s23, 3
      %s410 = scalar_select %p409, %s23, 3
      %p411 = scmp.lt.s32.totalorder %s408, 1
      %s412 = scalar_select %p411, %s408, 1
      %s413 = smul.addr %s410, 2
      %s414 = sadd.s32 %s412, %s413
      %s415 = smul.addr %s414, 8
      %s416 = scalar_lea.vmem %s4, %s415
      %s417 = smul.u32 2, %s22
      %s418 = smul.u32 2, %s22
      %p419 = scmp.lt.s32.totalorder %s418, 1
      %s420 = scalar_select %p419, %s418, 1
      %s421 = smul.addr %s420, 4
      %s422 = scalar_lea.vmem %s5, %s421
      %s423 = smul.u32 2, %s22
      %s424 = smul.u32 2, %s22
      %p425 = scmp.lt.s32.totalorder %s424, 1
      %s426 = scalar_select %p425, %s424, 1
      %s427 = smul.addr %s426, 4
      %s428 = scalar_lea.vmem %s6, %s427
      %s429 = smul.u32 2, %s22
      %p431 = scmp.eq.s32.totalorder %s23, 0
      %p432 = scmp.eq.s32.totalorder %s24, 0
      %p433 = pnand %p431, %p432
      %p434 = pneg %p433
      // Predicated region
      $region45: #{dbrx_model.15} parent=43 // pred_check
        _
      $region46: #{dbrx_model.15} parent=43 // pred_check_branch
        %436 = sbr.rel (%p433) target = $region48
      $region47: #{dbrx_model.15} parent=43 // pred_region
        %vm437 = vcmask 261120
        %438 = vst.msk [vmem:[#allocation2] sm:$0xff] %vm437, 0.0
        %439 = vst.msk [vmem:[#allocation2 + $0x8] sm:$0xff] %vm437, 0.0
      $region48: #{dbrx_model.15} parent=43 // pred_fallthru
        _
      %v440 = vld [vmem:[%s380] sm:$0xf]
      %v441 = vld [vmem:[%s380 + $0x4] sm:$0xf]
      %v442 = vld [vmem:[%s389] sm:$0xf]
      %v443 = vld [vmem:[%s389 + $0x4] sm:$0xf]
      %v444 = vld [vmem:[%s389 + $0x8] sm:$0xf]
      %v445 = vld [vmem:[%s389 + $0xc] sm:$0xf]
      %v448 = vunpack.c.l.b16 %v440
      %v449 = vunpack.c.l.b16 %v441
      %v450 = vpack.c.b16 %v449, %v448
      %v455 = vunpack.c.l.b16 %v442
      %v456 = vunpack.c.l.b16 %v443
      %v457 = vunpack.c.l.b16 %v444
      %v458 = vunpack.c.l.b16 %v445
      %v459 = vpack.c.b16 %v456, %v455
      %v460 = vpack.c.b16 %v458, %v457
      %vm463 = vcmask 261120
      %v465 = vsel %vm463, %v450, 0
      %467 = vmatpush.bf16.msra.mxu0 0
      %468 = vmatpush.bf16.msra.mxu0 0
      %469 = vmatpush.bf16.msra.mxu0 0
      %470 = vmatpush.bf16.msra.mxu0 0
      %471 = vmatpush.bf16.msra.mxu0 0
      %472 = vmatpush.bf16.msra.mxu0 0
      %473 = vmatpush.bf16.msra.mxu0 %v460
      %474 = vmatpush.bf16.msra.mxu0 %v459
      %475 = vmatmul.bf16.gmra.mxu0 %v465
      %v476 = vpop.f32.mrf.mxu0
      %v477 = vadd.f32 0.0, %v476
      %v478 = vpop.f32.mrf.mxu0
      %v479 = vadd.f32 0.0, %v478
      %480 = vdwg.mxu0
      %v481 = vld [vmem:[%s397] sm:$0xf]
      %v482 = vld [vmem:[%s397 + $0x4] sm:$0xf]
      %v483 = vld [vmem:[%s397 + $0x8] sm:$0xf]
      %v484 = vld [vmem:[%s397 + $0xc] sm:$0xf]
      %v489 = vunpack.c.l.b16 %v481
      %v490 = vunpack.c.l.b16 %v482
      %v491 = vunpack.c.l.b16 %v483
      %v492 = vunpack.c.l.b16 %v484
      %v493 = vpack.c.b16 %v490, %v489
      %v494 = vpack.c.b16 %v492, %v491
      %497 = vmatpush.bf16.msra.mxu0 0
      %498 = vmatpush.bf16.msra.mxu0 0
      %499 = vmatpush.bf16.msra.mxu0 0
      %500 = vmatpush.bf16.msra.mxu0 0
      %501 = vmatpush.bf16.msra.mxu0 0
      %502 = vmatpush.bf16.msra.mxu0 0
      %503 = vmatpush.bf16.msra.mxu0 %v494
      %504 = vmatpush.bf16.msra.mxu0 %v493
      %505 = vmatmul.bf16.gmra.mxu0 %v465
      %v506 = vpop.f32.mrf.mxu0
      %v507 = vadd.f32 0.0, %v506
      %v508 = vpop.f32.mrf.mxu0
      %v509 = vadd.f32 0.0, %v508
      %510 = vdwg.mxu0
      %v511 = vxor.u32 %v477, 2147483648
      %v512 = vxor.u32 %v479, 2147483648
      %v513 = vmul.f32 %v511, 1.442695
      %v514 = vpow.pop %v513
      %v515 = vmul.f32 %v512, 1.442695
      %v516 = vpow.pop %v515
      %v517 = vadd.f32 %v514, 1.0
      %v518 = vadd.f32 %v516, 1.0
      %v519 = vrcp.pop %v517
      %v520 = vmul.f32 %v517, %v519
      %v521 = vsub.f32 1.0, %v520
      %v522 = vmul.f32 %v519, %v521
      %v523 = vadd.f32 %v519, %v522
      %vm524 = vweird.f32 %v517
      %vm525 = vweird.f32 %v519
      %vm526 = vmor %vm524, %vm525
      %v527 = vsel %vm526, %v519, %v523
      %v528 = vand.u32 2147483647, %v517
      %vm529 = vcmp.eq.f32.partialorder %v528, 8.507059e+37
      %v530 = vand.u32 %v517, 2147483648
      %v531 = vor.u32 1.1754944e-38, %v530
      %v532 = vsel %vm529, %v531, %v527
      %v533 = vmul.f32 1.0, %v532
      %v534 = vrcp.pop %v518
      %v535 = vmul.f32 %v518, %v534
      %v536 = vsub.f32 1.0, %v535
      %v537 = vmul.f32 %v534, %v536
      %v538 = vadd.f32 %v534, %v537
      %vm539 = vweird.f32 %v518
      %vm540 = vweird.f32 %v534
      %vm541 = vmor %vm539, %vm540
      %v542 = vsel %vm541, %v534, %v538
      %v543 = vand.u32 2147483647, %v518
      %vm544 = vcmp.eq.f32.partialorder %v543, 8.507059e+37
      %v545 = vand.u32 %v518, 2147483648
      %v546 = vor.u32 1.1754944e-38, %v545
      %v547 = vsel %vm544, %v546, %v542
      %v548 = vmul.f32 1.0, %v547
      %v549 = vmul.f32 %v477, %v533
      %v550 = vmul.f32 %v479, %v548
      %v551 = vmul.f32 %v549, %v507
      %v552 = vmul.f32 %v550, %v509
      %v553 = vpack.c.bf16 %v552, %v551
      %v554 = vld [vmem:[%s406] sm:$0xf]
      %v555 = vld [vmem:[%s406 + $0x4] sm:$0xf]
      %v556 = vld [vmem:[%s406 + $0x8] sm:$0xf]
      %v557 = vld [vmem:[%s406 + $0xc] sm:$0xf]
      %v558 = vld [vmem:[%s406 + $0x10] sm:$0xf]
      %v559 = vld [vmem:[%s406 + $0x14] sm:$0xf]
      %v560 = vld [vmem:[%s406 + $0x18] sm:$0xf]
      %v561 = vld [vmem:[%s406 + $0x1c] sm:$0xf]
      %v570 = vunpack.c.l.b16 %v554
      %v571 = vunpack.c.l.b16 %v555
      %v572 = vunpack.c.l.b16 %v556
      %v573 = vunpack.c.l.b16 %v557
      %v574 = vunpack.c.l.b16 %v558
      %v575 = vunpack.c.l.b16 %v559
      %v576 = vunpack.c.l.b16 %v560
      %v577 = vunpack.c.l.b16 %v561
      %v578 = vpack.c.b16 %v571, %v570
      %v579 = vpack.c.b16 %v573, %v572
      %v580 = vpack.c.b16 %v575, %v574
      %v581 = vpack.c.b16 %v577, %v576
      %vm586 = vcmask 523264
      %v588 = vsel %vm586, %v553, 0
      %590 = vmatpush.bf16.msra.mxu0 0
      %591 = vmatpush.bf16.msra.mxu0 0
      %592 = vmatpush.bf16.msra.mxu0 0
      %593 = vmatpush.bf16.msra.mxu0 0
      %594 = vmatpush.bf16.msra.mxu0 %v581
      %595 = vmatpush.bf16.msra.mxu0 %v580
      %596 = vmatpush.bf16.msra.mxu0 %v579
      %597 = vmatpush.bf16.msra.mxu0 %v578
      %598 = vmatmul.bf16.gmra.mxu0 %v588
      %v599 = vpop.f32.mrf.mxu0
      %v600 = vadd.f32 0.0, %v599
      %v601 = vpop.f32.mrf.mxu0
      %v602 = vadd.f32 0.0, %v601
      %603 = vdwg.mxu0
      %v604 = vld [vmem:[#allocation2] sm:$0xff]
      %v605 = vld [vmem:[#allocation2 + $0x8] sm:$0xff]
      %v606 = vld [vmem:[%s416] sm:$0xff]
      %v607 = vld [vmem:[%s416 + $0x8] sm:$0xff]
      %609 = vset.pattern.permute.xlu0 0
      %610 = vperm.xlu0 %609, %v606
      %v611 = vpop.permute.xlu0 %610
      %614 = vset.pattern.permute.xlu0 0
      %615 = vperm.xlu0 %614, %v607
      %v616 = vpop.permute.xlu0 %615
      %v618 = vmul.f32 %v611, %v600
      %v619 = vmul.f32 %v616, %v602
      %v620 = vadd.f32 %v604, %v618
      %v621 = vadd.f32 %v605, %v619
      %622 = vst.msk [vmem:[#allocation2] sm:$0xff] %vm463, %v620
      %623 = vst.msk [vmem:[#allocation2 + $0x8] sm:$0xff] %vm463, %v621
      %p624 = scmp.eq.s32.totalorder %s23, 3
      %p625 = pnand %p624, %p432
      %p626 = pneg %p625
      // Predicated region
      $region49: #{dbrx_model.15} parent=43 // pred_check
        _
      $region50: #{dbrx_model.15} parent=43 // pred_check_branch
        %628 = sbr.rel (%p625) target = $region52
      $region51: #{dbrx_model.15} parent=43 // pred_region
        %v629 = vld [vmem:[#allocation2] sm:$0xff]
        %v630 = vld [vmem:[#allocation2 + $0x8] sm:$0xff]
        %v631 = vld [vmem:[%s422] sm:$0xf]
        %v632 = vld [vmem:[%s422 + $0x4] sm:$0xf]
        %v633 = vunpack.c.l.bf16 %v631
        %v634 = vunpack.c.l.bf16 %v632
        %v635 = vadd.f32 %v629, %v633
        %v636 = vadd.f32 %v630, %v634
        %v637 = vpack.c.bf16 %v635, %v635
        %v638 = vpack.c.bf16 %v636, %v636
        %vm639 = vcmask 257024
        %640 = vst.msk [vmem:[%s428] sm:$0xf] %vm639, %v637
        %641 = vst.msk [vmem:[%s428 + $0x4] sm:$0xf] %vm639, %v638
      $region52: #{dbrx_model.15} parent=43 // pred_fallthru
        _
      %s642 = smul.u32 2, %s22
      %p643 = scmp.lt.s32.totalorder %s642, 1
      %s644 = scalar_select %p643, %s642, 1
      %s645 = smul.addr %s644, 4
      %s646 = scalar_lea.vmem %s6, %s645
      // Predicated region
      $region53: #{dbrx_model.15} parent=43 // pred_check
        %p647 = pneg %p218
      $region54: #{dbrx_model.15} parent=43 // pred_check_branch
        %649 = sbr.rel (%p647) target = $region56
      $region55: #{dbrx_model.15} parent=43 // pred_region
        %s650 = smul.u32 2, %s22
      $region56: #{dbrx_model.15} parent=43 // pred_fallthru
        _
      // Predicated region
      $region57: #{dbrx_model.15} parent=43 // pred_check
        %p651 = pneg %p218
      $region58: #{dbrx_model.15} parent=43 // pred_check_branch
        %653 = sbr.rel (%p651) target = $region60
      $region59: #{dbrx_model.15} parent=43 // pred_region
        %s654 = smul.u32 2, %s22
        %p655 = scmp.lt.s32.totalorder %s654, 1
        %s656 = scalar_select %p655, %s654, 1
        %s657 = smul.addr %s656, 4
        %s658 = scalar_lea.vmem %s6, %s657
      $region60: #{dbrx_model.15} parent=43 // pred_fallthru
        _
    $region44: #{dbrx_model.15} parent=5 // pred_fallthru
      _
    %p659 = scmp.le.s32.totalorder 2, %s12
    // Predicated region
    $region61: #{dbrx_model.15} parent=5 // pred_check
      %p660 = pneg %p659
    $region62: #{dbrx_model.15} parent=5 // pred_check_branch
      %662 = sbr.rel (%p660) target = $region64
    $region63: #{dbrx_model.15} parent=5 // pred_region
      %s663 = ssub.s32 %s12, 2
    $region64: #{dbrx_model.15} parent=5 // pred_fallthru
      _
  $region6: #{dbrx_model.15} parent=0 // loop_footer
    %s16 = sadd.s32 1, %s12
  $region7: #{dbrx_model.15} parent=0 // loop_footer_branch
    %11 = sbr.rel target = $region3
  $region8: #{dbrx_model.15} parent=0 // loop_exit
    _

// kernel: dbrx_model.21
$region0: #{dbrx_model.21}
  #allocation0 [shape = 'u32[]', space=smem, size = 0x4, offset = 0x4, fixed_abs, tag = 'smem constant byte address 0x4 - core index']
  #allocation1 [shape = 'u32[72,128]{1,0:T(1,128)}', space=vmem, size = 0x9000, scoped, tag = 'internal scratch']
  %s0 = inlined_call_operand.vmem [shape: bf16[16,32], index: 0, kind: input, shape index: {}]
  %s1 = inlined_call_operand.vmem [shape: f32[1,32], index: 1, kind: input, shape index: {}]
  %s2 = inlined_call_operand.hbm [shape: bf16[16,32], index: 2, kind: output, shape index: {}]
  %s3 = sld [smem:[#allocation0]]
  $region18: #{dbrx_model.21} parent=0
    _
  %s5 = ssub.s32 1, %s3
  %s6 = scalar_select 0, %s5, %s3
  $region1: #{dbrx_model.21} parent=0
    #allocation2 [shape = 'u8[4096]{0}', space=vmem, size = 0x1000, scoped, tag = 'output window, operand 0, single buffered']
    #allocation3 [shape = 's32[1]{0}', space=sflag, size = 0x4, scoped, tag = 'scoped memory for dbrx_model.21']
    %7 = vsyncpa [#allocation3], 0
    // Predicated region
    $region2: #{dbrx_model.21} parent=1 // pred_check
      _
    $region3: #{dbrx_model.21} parent=1 // pred_check_branch
      %9 = sbr.rel (0) target = $region5
    $region4: #{dbrx_model.21} parent=1 // pred_region
      _
    $region5: #{dbrx_model.21} parent=1 // pred_fallthru
      _
    // Predicated region
    $region6: #{dbrx_model.21} parent=1 // pred_check
      _
    $region7: #{dbrx_model.21} parent=1 // pred_check_branch
      %11 = sbr.rel (0) target = $region9
    $region8: #{dbrx_model.21} parent=1 // pred_region
      _
    $region9: #{dbrx_model.21} parent=1 // pred_fallthru
      _
    %v12 = vld [vmem:[%s0] sm:$0xf]
    %v13 = vld [vmem:[%s0 + $0x4] sm:$0xf]
    %v14 = vunpack.c.l.bf16 %v12
    %v15 = vunpack.c.l.bf16 %v13
    %vm16 = vcmask 261120
    %v17 = vsel %vm16, %v14, 0.0
    %18 = vadd.xlane.f32.xlu0 %v17
    %v19 = vpop.xlane.xlu0 %18
    %v20 = vsel %vm16, %v15, 0.0
    %21 = vadd.xlane.f32.xlu0 %v20
    %v22 = vpop.xlane.xlu0 %21
    %v23 = vrcp.pop 32.0
    %v24 = vmul.f32 32.0, %v23
    %v25 = vsub.f32 1.0, %v24
    %v26 = vmul.f32 %v23, %v25
    %v27 = vadd.f32 %v23, %v26
    %vm28 = vweird.f32 %v23
    %v29 = vsel %vm28, %v23, %v27
    %v30 = vmul.f32 %v19, %v29
    %v31 = vmul.f32 %v22, %v29
    %v32 = vsub.f32 %v14, %v30
    %v33 = vsub.f32 %v15, %v31
    %v34 = vmul.f32 %v32, %v32
    %v35 = vmul.f32 %v33, %v33
    %v36 = vsel %vm16, %v34, 0.0
    %37 = vadd.xlane.f32.xlu0 %v36
    %v38 = vpop.xlane.xlu0 %37
    %v39 = vsel %vm16, %v35, 0.0
    %40 = vadd.xlane.f32.xlu0 %v39
    %v41 = vpop.xlane.xlu0 %40
    %v42 = vmul.f32 %v38, %v29
    %v43 = vmul.f32 %v41, %v29
    %v44 = vadd.f32 %v42, 1e-05
    %v45 = vadd.f32 %v43, 1e-05
    %v46 = vrsqrt.pop %v44
    %v47 = vmul.f32 %v46, %v44
    %v48 = vmul.f32 %v47, %v46
    %v49 = vmul.f32 0.5, %v48
    %v50 = vsub.f32 1.5, %v49
    %v51 = vmul.f32 %v46, %v50
    %vm52 = vweird.f32 %v44
    %vm53 = vweird.f32 %v46
    %vm54 = vmor %vm52, %vm53
    %v55 = vsel %vm54, %v46, %v51
    %v56 = vrsqrt.pop %v45
    %v57 = vmul.f32 %v56, %v45
    %v58 = vmul.f32 %v57, %v56
    %v59 = vmul.f32 0.5, %v58
    %v60 = vsub.f32 1.5, %v59
    %v61 = vmul.f32 %v56, %v60
    %vm62 = vweird.f32 %v45
    %vm63 = vweird.f32 %v56
    %vm64 = vmor %vm62, %vm63
    %v65 = vsel %vm64, %v56, %v61
    %v66 = vmul.f32 %v32, %v55
    %v67 = vmul.f32 %v33, %v65
    %v68 = vld [vmem:[%s1] sm:$0x1]
    %v70 = vperm.slane %v68, 0
    %v72 = vmul.f32 %v66, %v70
    %v73 = vmul.f32 %v67, %v70
    %v74 = vpack.c.bf16 %v72, %v72
    %v75 = vpack.c.bf16 %v73, %v73
    %vm76 = vcmask 257024
    %77 = vst.msk [vmem:[#allocation2] sm:$0xf] %vm76, %v74
    %78 = vst.msk [vmem:[#allocation2 + $0x4] sm:$0xf] %vm76, %v75
    // Predicated region
    $region10: #{dbrx_model.21} parent=1 // pred_check
      _
    $region11: #{dbrx_model.21} parent=1 // pred_check_branch
      %80 = sbr.rel (0) target = $region13
    $region12: #{dbrx_model.21} parent=1 // pred_region
      %82 = vsyncadd [#allocation3], 0
      %s83 = sshll.u32 [#allocation2], 4
      %s84 = int_to_ptr.vmem [resolvable:$true] %s83
      %s85 = sshll.u32 %s2, 4
      %s86 = int_to_ptr.hbm [resolvable:$true] %s85
      %91 = dma.vmem_to_hbm [thread:$0]  %s84, 128, %s86, [#allocation3], 64, 64, 4
    $region13: #{dbrx_model.21} parent=1 // pred_fallthru
      _
    // Predicated region
    $region14: #{dbrx_model.21} parent=1 // pred_check
      _
    $region15: #{dbrx_model.21} parent=1 // pred_check_branch
      %93 = sbr.rel (0) target = $region17
    $region16: #{dbrx_model.21} parent=1 // pred_region
      %95 = dma.done [#allocation3], 128
    $region17: #{dbrx_model.21} parent=1 // pred_fallthru
      _
    %96 = vsyncpa [#allocation3], 1

</llo_original>
